<compile_context>
chip_gen: v7x
topology: tpu7x:2x2x1
jax: 0.10.0
libtpu: 0.0.40
codegen_flags: <defaults>
</compile_context>

<pallas_src>
import jax
import jax.numpy as jnp
from jax import lax
from jax.experimental import pallas as pl
from jax.experimental.pallas import tpu as pltpu

OUT_PAD = 128   # lane-dense FC output width (real outputs live in cols 0:3)


def lstm_fc_kernel(x_ref,                 # (T*Bp, I)    bf16, time-major, batch-padded
                   wih0_ref,              # (I, 4*GP)    bf16  layer-0 input proj (layer-1 cols zero)
                   b_ref,                 # (1, 4*GP)    f32   pre-summed biases, both layers
                   wrec_ref,              # (GP, 4*GP)   bf16  packed recurrent / inter-layer weight
                   wfc_ref,               # (GP, OUT_PAD) bf16 FC (rows 0..H-1 zero, rows H..2H-1 real)
                   bfc_ref,               # (1, OUT_PAD) f32
                   out_ref,               # (Bp, OUT_PAD) f32
                   g_ref):                # scratch (T*Bp, 4*GP) f32: hoisted gate inputs
    Bp = out_ref.shape[0]
    T = x_ref.shape[0] // Bp
    GP = wrec_ref.shape[0]                # 2*H = 128: packed [h0 | h1] state width

    # ---- hoisted layer-0 input projection + biases: one big bf16 matmul, f32 accumulate ----
    g_ref[...] = (jnp.dot(x_ref[...], wih0_ref[...],
                          preferred_element_type=jnp.float32) + b_ref[...])

    def wave(h, c, gates_in):
        # One wave = layer-0 step w and layer-1 step w-1, packed along lanes.
        # Gate blocks: [i0|i1, f0|f1, g0|g1, o0|o1], each 128 lanes -> aligned slices.
        gates = gates_in + jnp.dot(h.astype(jnp.bfloat16), wrec_ref[...],
                                   preferred_element_type=jnp.float32)
        i_blk = jax.nn.sigmoid(gates[:, 0 * GP:1 * GP])
        f_blk = jax.nn.sigmoid(gates[:, 1 * GP:2 * GP])
        g_blk = jnp.tanh(gates[:, 2 * GP:3 * GP])
        o_blk = jax.nn.sigmoid(gates[:, 3 * GP:4 * GP])
        c_new = f_blk * c + i_blk * g_blk
        h_new = o_blk * jnp.tanh(c_new)
        return h_new, c_new

    zeros = jnp.zeros((Bp, GP), jnp.float32)

    # ---- wave 0 (peeled): only layer 0 is real; wipe the layer-1 half so layer-1 step 0
    #      starts from h1 = c1 = 0 at wave 1. ----
    h, c = wave(zeros, zeros, g_ref[0:Bp, :])
    lane = lax.broadcasted_iota(jnp.int32, (Bp, GP), 1)
    is_l0 = lane < (GP // 2)
    h = jnp.where(is_l0, h, 0.0)
    c = jnp.where(is_l0, c, 0.0)

    # ---- waves 1 .. T-1: steady state (layer-0 step w + layer-1 step w-1 per wave) ----
    def body(w, carry):
        h, c = carry
        row = pl.multiple_of(w * Bp, Bp)
        return wave(h, c, g_ref[pl.ds(row, Bp), :])

    h, c = lax.fori_loop(1, T, body, (h, c), unroll=True)

    # ---- wave T (peeled): layer-1 step T-1.  The layer-0 half recomputes a junk step from
    #      g_pre[T-1]; it stays finite and is annihilated by wfc's zero rows. ----
    h, _ = wave(h, c, g_ref[(T - 1) * Bp:T * Bp, :])

    # ---- final FC on h1[T-1] (upper H rows of wfc hold the real weights) ----
    out_ref[...] = (jnp.dot(h.astype(jnp.bfloat16), wfc_ref[...],
                            preferred_element_type=jnp.float32) + bfc_ref[...])


def lstm_model_forward(x, packed):
    """x: (B, T, input_size) batch-first (PyTorch convention). Returns (B, 3)."""
    B, T, I = x.shape
    Bp = ((B + 7) // 8) * 8                             # sublane multiple for f32
    x_pad = jnp.zeros((Bp, T, I), jnp.float32).at[:B].set(x)
    x2d = jnp.transpose(x_pad, (1, 0, 2)).reshape(T * Bp, I).astype(jnp.bfloat16)

    wih0, b, wrec, wfc, bfc = packed
    GP4 = wrec.shape[1]

    vmem = pl.BlockSpec(memory_space=pltpu.MemorySpace.VMEM)
    out = pl.pallas_call(
        lstm_fc_kernel,
        out_shape=jax.ShapeDtypeStruct((Bp, OUT_PAD), jnp.float32),
        in_specs=[vmem] * 6,
        out_specs=vmem,
        scratch_shapes=[pltpu.VMEM((T * Bp, GP4), jnp.float32)],   # hoisted gate inputs
    )(x2d, wih0, b, wrec, wfc, bfc)
    return out[:B, :3]


def init_torch_params(key, input_size, hidden_size):
    """PyTorch-shaped LSTM/Linear parameters, gate order (i, f, g, o), U(-1/sqrt(H), 1/sqrt(H))."""
    H = hidden_size
    k = 1.0 / (H ** 0.5)
    keys = jax.random.split(key, 10)
    u = lambda kk, shape: jax.random.uniform(kk, shape, jnp.float32, -k, k)
    return dict(
        w_ih0=u(keys[0], (4 * H, input_size)), w_hh0=u(keys[1], (4 * H, H)),
        b_ih0=u(keys[2], (4 * H,)),            b_hh0=u(keys[3], (4 * H,)),
        w_ih1=u(keys[4], (4 * H, H)),          w_hh1=u(keys[5], (4 * H, H)),
        b_ih1=u(keys[6], (4 * H,)),            b_hh1=u(keys[7], (4 * H,)),
        w_fc=u(keys[8], (3, H)),               b_fc=u(keys[9], (3,)),
    )


def pack_params(p, input_size, hidden_size):
    """Pack into the wavefront layout: state [h0|h1] along lanes, gate blocks of 2H lanes.

    Weights are stored bf16 (MXU operands); biases stay f32 (added post-matmul).
    """
    H = hidden_size
    GP = 2 * H
    assert GP % 128 == 0, "packed state width (2*hidden) must be a lane multiple (128)"

    def gate_block(w, g):
        # torch layout (4H, in_dim); gate g rows, transposed to (in_dim, H)
        return w[g * H:(g + 1) * H, :].T

    # layer-0 input projection -> layer-0 sub-lanes of each gate block (layer-1 cols zero)
    wih0 = jnp.zeros((input_size, 4 * GP), jnp.float32)
    for g in range(4):
        wih0 = wih0.at[:, g * GP:g * GP + H].set(gate_block(p["w_ih0"], g))

    # packed recurrent / inter-layer weight:
    #   rows 0..H-1  = h0 -> (layer-0 recurrent gates, layer-1 input-projection gates)
    #   rows H..2H-1 = h1 -> (zeros,                   layer-1 recurrent gates)
    wrec = jnp.zeros((GP, 4 * GP), jnp.float32)
    for g in range(4):
        wrec = wrec.at[:H, g * GP:g * GP + H].set(gate_block(p["w_hh0"], g))
        wrec = wrec.at[:H, g * GP + H:(g + 1) * GP].set(gate_block(p["w_ih1"], g))
        wrec = wrec.at[H:, g * GP + H:(g + 1) * GP].set(gate_block(p["w_hh1"], g))

    # pre-summed biases for both layers, laid out to match the gate blocks
    b0 = p["b_ih0"] + p["b_hh0"]
    b1 = p["b_ih1"] + p["b_hh1"]
    b = jnp.zeros((1, 4 * GP), jnp.float32)
    for g in range(4):
        b = b.at[0, g * GP:g * GP + H].set(b0[g * H:(g + 1) * H])
        b = b.at[0, g * GP + H:(g + 1) * GP].set(b1[g * H:(g + 1) * H])

    # FC: only the h1 half (rows H..2H-1) carries weights; rows 0..H-1 stay exactly zero
    # so the junk layer-0 half of the final wave contributes nothing.
    wfc = jnp.zeros((GP, OUT_PAD), jnp.float32).at[H:, :3].set(p["w_fc"].T)
    bfc = jnp.zeros((1, OUT_PAD), jnp.float32).at[0, :3].set(p["b_fc"])

    return (wih0.astype(jnp.bfloat16), b, wrec.astype(jnp.bfloat16),
            wfc.astype(jnp.bfloat16), bfc)


def lstm_model_reference(x, p):
    """Pure-JAX reference of the PyTorch module forward (inference mode)."""
    H = p["w_hh0"].shape[1]
    B = x.shape[0]

    def run_layer(seq, w_ih, w_hh, b):
        def step(carry, x_t):
            h, c = carry
            gates = x_t @ w_ih.T + h @ w_hh.T + b
            i, f, g, o = jnp.split(gates, 4, axis=-1)
            c = jax.nn.sigmoid(f) * c + jax.nn.sigmoid(i) * jnp.tanh(g)
            h = jax.nn.sigmoid(o) * jnp.tanh(c)
            return (h, c), h

        init = (jnp.zeros((B, H), jnp.float32), jnp.zeros((B, H), jnp.float32))
        _, hs = jax.lax.scan(step, init, jnp.transpose(seq, (1, 0, 2)))
        return jnp.transpose(hs, (1, 0, 2))

    h1 = run_layer(x, p["w_ih0"], p["w_hh0"], p["b_ih0"] + p["b_hh0"])
    h2 = run_layer(h1, p["w_ih1"], p["w_hh1"], p["b_ih1"] + p["b_hh1"])
    return h2[:, -1, :] @ p["w_fc"].T + p["b_fc"]


if __name__ == "__main__":
    key = jax.random.PRNGKey(0)
    k_x, k_p = jax.random.split(key)

    batch, seq, input_size, hidden = 2, 8, 16, 64
    x = jax.random.normal(k_x, (batch, seq, input_size), jnp.float32)
    params = init_torch_params(k_p, input_size, hidden)
    packed = pack_params(params, input_size, hidden)

    out = jax.block_until_ready(lstm_model_forward(x, packed))
    assert out.shape == (batch, 3)

    ref = jax.block_until_ready(lstm_model_reference(x, params))
    max_diff = float(jnp.max(jnp.abs(out - ref)))
    # Tolerance reflects bf16 MXU operands (weights + hidden-state casts) vs the f32 reference.
    assert max_diff < 2e-2, f"kernel/reference mismatch: max_diff={max_diff}"

    print("KERNEL_OK")
</pallas_src>

<mosaic_0001>
module attributes {stable_mosaic.version = 11 : i64} {
  func.func @lstm_fc_kernel(%arg0: memref<64x16xbf16, #tpu.memory_space<vmem>>, %arg1: memref<16x512xbf16, #tpu.memory_space<vmem>>, %arg2: memref<1x512xf32, #tpu.memory_space<vmem>>, %arg3: memref<128x512xbf16, #tpu.memory_space<vmem>>, %arg4: memref<128x128xbf16, #tpu.memory_space<vmem>>, %arg5: memref<1x128xf32, #tpu.memory_space<vmem>>, %arg6: memref<8x128xf32, #tpu.memory_space<vmem>>, %arg7: memref<64x512xf32, #tpu.memory_space<vmem>>) attributes {dimension_semantics = [], scalar_prefetch = 0 : i64, scratch_operands = 1 : i64, tpu.core_type = #tpu.core_type<tc>} {
    %c0 = arith.constant 0 : index
    %c0_0 = arith.constant 0 : index
    %0 = vector.load %arg0[%c0, %c0_0] : memref<64x16xbf16, #tpu.memory_space<vmem>>, vector<64x16xbf16>
    %c0_1 = arith.constant 0 : index
    %c0_2 = arith.constant 0 : index
    %1 = vector.load %arg1[%c0_1, %c0_2] : memref<16x512xbf16, #tpu.memory_space<vmem>>, vector<16x512xbf16>
    %cst = arith.constant dense<0.000000e+00> : vector<64x512xf32>
    %2 = tpu.matmul %0, %1, %cst {dimension_numbers = #tpu.dot_dimension_numbers<[1], [0], [0], [1], [0, 0, 1, 1], [], []>} : vector<64x16xbf16>, vector<16x512xbf16>, vector<64x512xf32> -> vector<64x512xf32>
    %c0_3 = arith.constant 0 : index
    %c0_4 = arith.constant 0 : index
    %3 = vector.load %arg2[%c0_3, %c0_4] : memref<1x512xf32, #tpu.memory_space<vmem>>, vector<1x512xf32>
    %4 = vector.broadcast %3 : vector<1x512xf32> to vector<64x512xf32>
    %5 = arith.addf %2, %4 : vector<64x512xf32>
    %c0_5 = arith.constant 0 : index
    %c0_6 = arith.constant 0 : index
    %6 = vector.load %arg7[%c0_5, %c0_6] : memref<64x512xf32, #tpu.memory_space<vmem>>, vector<64x512xf32>
    tpu.vector_store %arg7[%c0_5, %c0_6], %5 {strides = array<i32>} : memref<64x512xf32, #tpu.memory_space<vmem>>, vector<64x512xf32>,
    %cst_7 = arith.constant 0.000000e+00 : f32
    %7 = vector.broadcast %cst_7 : f32 to vector<8x128xf32>
    %c0_8 = arith.constant 0 : index
    %c0_9 = arith.constant 0 : index
    %8 = vector.load %arg7[%c0_8, %c0_9] : memref<64x512xf32, #tpu.memory_space<vmem>>, vector<8x512xf32>
    %9 = arith.truncf %7 : vector<8x128xf32> to vector<8x128xbf16>
    %c0_10 = arith.constant 0 : index
    %c0_11 = arith.constant 0 : index
    %10 = vector.load %arg3[%c0_10, %c0_11] : memref<128x512xbf16, #tpu.memory_space<vmem>>, vector<128x512xbf16>
    %cst_12 = arith.constant dense<0.000000e+00> : vector<8x512xf32>
    %11 = tpu.matmul %9, %10, %cst_12 {dimension_numbers = #tpu.dot_dimension_numbers<[1], [0], [0], [1], [0, 0, 1, 1], [], []>} : vector<8x128xbf16>, vector<128x512xbf16>, vector<8x512xf32> -> vector<8x512xf32>
    %12 = arith.addf %8, %11 : vector<8x512xf32>
    %13 = vector.extract_strided_slice %12 {offsets = [0, 0], sizes = [8, 128], strides = [1, 1]} : vector<8x512xf32> to vector<8x128xf32>
    %14 = arith.negf %13 : vector<8x128xf32>
    %15 = math.exp %14 : vector<8x128xf32>
    %cst_13 = arith.constant 1.000000e+00 : f32
    %16 = vector.broadcast %cst_13 : f32 to vector<8x128xf32>
    %17 = arith.addf %16, %15 : vector<8x128xf32>
    %18 = arith.divf %16, %17 : vector<8x128xf32>
    %19 = vector.extract_strided_slice %12 {offsets = [0, 128], sizes = [8, 128], strides = [1, 1]} : vector<8x512xf32> to vector<8x128xf32>
    %20 = arith.negf %19 : vector<8x128xf32>
    %21 = math.exp %20 : vector<8x128xf32>
    %cst_14 = arith.constant 1.000000e+00 : f32
    %22 = vector.broadcast %cst_14 : f32 to vector<8x128xf32>
    %23 = arith.addf %22, %21 : vector<8x128xf32>
    %24 = arith.divf %22, %23 : vector<8x128xf32>
    %25 = vector.extract_strided_slice %12 {offsets = [0, 256], sizes = [8, 128], strides = [1, 1]} : vector<8x512xf32> to vector<8x128xf32>
    %26 = math.tanh %25 : vector<8x128xf32>
    %27 = vector.extract_strided_slice %12 {offsets = [0, 384], sizes = [8, 128], strides = [1, 1]} : vector<8x512xf32> to vector<8x128xf32>
    %28 = arith.negf %27 : vector<8x128xf32>
    %29 = math.exp %28 : vector<8x128xf32>
    %cst_15 = arith.constant 1.000000e+00 : f32
    %30 = vector.broadcast %cst_15 : f32 to vector<8x128xf32>
    %31 = arith.addf %30, %29 : vector<8x128xf32>
    %32 = arith.divf %30, %31 : vector<8x128xf32>
    %33 = arith.mulf %24, %7 : vector<8x128xf32>
    %34 = arith.mulf %18, %26 : vector<8x128xf32>
    %35 = arith.addf %33, %34 : vector<8x128xf32>
    %36 = math.tanh %35 : vector<8x128xf32>
    %37 = arith.mulf %32, %36 : vector<8x128xf32>
    %38 = tpu.iota {dimensions = array<i32: 1>} : vector<8x128xi32>
    %c64_i32 = arith.constant 64 : i32
    %39 = vector.broadcast %c64_i32 : i32 to vector<8x128xi32>
    %40 = arith.cmpi slt, %38, %39 : vector<8x128xi32>
    %cst_16 = arith.constant 0.000000e+00 : f32
    %41 = vector.broadcast %cst_16 : f32 to vector<8x128xf32>
    %42 = arith.select %40, %37, %41 : vector<8x128xi1>, vector<8x128xf32>
    %cst_17 = arith.constant 0.000000e+00 : f32
    %43 = vector.broadcast %cst_17 : f32 to vector<8x128xf32>
    %44 = arith.select %40, %35, %43 : vector<8x128xi1>, vector<8x128xf32>
    %c1_i32 = arith.constant 1 : i32
    %c8_i32 = arith.constant 8 : i32
    %45 = arith.muli %c1_i32, %c8_i32 : i32
    %46 = tpu.assume_multiple %45, 8 : i32
    %47 = arith.index_cast %46 : i32 to index
    %c0_18 = arith.constant 0 : index
    %48 = vector.load %arg7[%47, %c0_18] : memref<64x512xf32, #tpu.memory_space<vmem>>, vector<8x512xf32>
    %49 = arith.truncf %42 : vector<8x128xf32> to vector<8x128xbf16>
    %c0_19 = arith.constant 0 : index
    %c0_20 = arith.constant 0 : index
    %50 = vector.load %arg3[%c0_19, %c0_20] : memref<128x512xbf16, #tpu.memory_space<vmem>>, vector<128x512xbf16>
    %cst_21 = arith.constant dense<0.000000e+00> : vector<8x512xf32>
    %51 = tpu.matmul %49, %50, %cst_21 {dimension_numbers = #tpu.dot_dimension_numbers<[1], [0], [0], [1], [0, 0, 1, 1], [], []>} : vector<8x128xbf16>, vector<128x512xbf16>, vector<8x512xf32> -> vector<8x512xf32>
    %52 = arith.addf %48, %51 : vector<8x512xf32>
    %53 = vector.extract_strided_slice %52 {offsets = [0, 0], sizes = [8, 128], strides = [1, 1]} : vector<8x512xf32> to vector<8x128xf32>
    %54 = arith.negf %53 : vector<8x128xf32>
    %55 = math.exp %54 : vector<8x128xf32>
    %cst_22 = arith.constant 1.000000e+00 : f32
    %56 = vector.broadcast %cst_22 : f32 to vector<8x128xf32>
    %57 = arith.addf %56, %55 : vector<8x128xf32>
    %58 = arith.divf %56, %57 : vector<8x128xf32>
    %59 = vector.extract_strided_slice %52 {offsets = [0, 128], sizes = [8, 128], strides = [1, 1]} : vector<8x512xf32> to vector<8x128xf32>
    %60 = arith.negf %59 : vector<8x128xf32>
    %61 = math.exp %60 : vector<8x128xf32>
    %cst_23 = arith.constant 1.000000e+00 : f32
    %62 = vector.broadcast %cst_23 : f32 to vector<8x128xf32>
    %63 = arith.addf %62, %61 : vector<8x128xf32>
    %64 = arith.divf %62, %63 : vector<8x128xf32>
    %65 = vector.extract_strided_slice %52 {offsets = [0, 256], sizes = [8, 128], strides = [1, 1]} : vector<8x512xf32> to vector<8x128xf32>
    %66 = math.tanh %65 : vector<8x128xf32>
    %67 = vector.extract_strided_slice %52 {offsets = [0, 384], sizes = [8, 128], strides = [1, 1]} : vector<8x512xf32> to vector<8x128xf32>
    %68 = arith.negf %67 : vector<8x128xf32>
    %69 = math.exp %68 : vector<8x128xf32>
    %cst_24 = arith.constant 1.000000e+00 : f32
    %70 = vector.broadcast %cst_24 : f32 to vector<8x128xf32>
    %71 = arith.addf %70, %69 : vector<8x128xf32>
    %72 = arith.divf %70, %71 : vector<8x128xf32>
    %73 = arith.mulf %64, %44 : vector<8x128xf32>
    %74 = arith.mulf %58, %66 : vector<8x128xf32>
    %75 = arith.addf %73, %74 : vector<8x128xf32>
    %76 = math.tanh %75 : vector<8x128xf32>
    %77 = arith.mulf %72, %76 : vector<8x128xf32>
    %c2_i32 = arith.constant 2 : i32
    %c8_i32_25 = arith.constant 8 : i32
    %78 = arith.muli %c2_i32, %c8_i32_25 : i32
    %79 = tpu.assume_multiple %78, 8 : i32
    %80 = arith.index_cast %79 : i32 to index
    %c0_26 = arith.constant 0 : index
    %81 = vector.load %arg7[%80, %c0_26] : memref<64x512xf32, #tpu.memory_space<vmem>>, vector<8x512xf32>
    %82 = arith.truncf %77 : vector<8x128xf32> to vector<8x128xbf16>
    %c0_27 = arith.constant 0 : index
    %c0_28 = arith.constant 0 : index
    %83 = vector.load %arg3[%c0_27, %c0_28] : memref<128x512xbf16, #tpu.memory_space<vmem>>, vector<128x512xbf16>
    %cst_29 = arith.constant dense<0.000000e+00> : vector<8x512xf32>
    %84 = tpu.matmul %82, %83, %cst_29 {dimension_numbers = #tpu.dot_dimension_numbers<[1], [0], [0], [1], [0, 0, 1, 1], [], []>} : vector<8x128xbf16>, vector<128x512xbf16>, vector<8x512xf32> -> vector<8x512xf32>
    %85 = arith.addf %81, %84 : vector<8x512xf32>
    %86 = vector.extract_strided_slice %85 {offsets = [0, 0], sizes = [8, 128], strides = [1, 1]} : vector<8x512xf32> to vector<8x128xf32>
    %87 = arith.negf %86 : vector<8x128xf32>
    %88 = math.exp %87 : vector<8x128xf32>
    %cst_30 = arith.constant 1.000000e+00 : f32
    %89 = vector.broadcast %cst_30 : f32 to vector<8x128xf32>
    %90 = arith.addf %89, %88 : vector<8x128xf32>
    %91 = arith.divf %89, %90 : vector<8x128xf32>
    %92 = vector.extract_strided_slice %85 {offsets = [0, 128], sizes = [8, 128], strides = [1, 1]} : vector<8x512xf32> to vector<8x128xf32>
    %93 = arith.negf %92 : vector<8x128xf32>
    %94 = math.exp %93 : vector<8x128xf32>
    %cst_31 = arith.constant 1.000000e+00 : f32
    %95 = vector.broadcast %cst_31 : f32 to vector<8x128xf32>
    %96 = arith.addf %95, %94 : vector<8x128xf32>
    %97 = arith.divf %95, %96 : vector<8x128xf32>
    %98 = vector.extract_strided_slice %85 {offsets = [0, 256], sizes = [8, 128], strides = [1, 1]} : vector<8x512xf32> to vector<8x128xf32>
    %99 = math.tanh %98 : vector<8x128xf32>
    %100 = vector.extract_strided_slice %85 {offsets = [0, 384], sizes = [8, 128], strides = [1, 1]} : vector<8x512xf32> to vector<8x128xf32>
    %101 = arith.negf %100 : vector<8x128xf32>
    %102 = math.exp %101 : vector<8x128xf32>
    %cst_32 = arith.constant 1.000000e+00 : f32
    %103 = vector.broadcast %cst_32 : f32 to vector<8x128xf32>
    %104 = arith.addf %103, %102 : vector<8x128xf32>
    %105 = arith.divf %103, %104 : vector<8x128xf32>
    %106 = arith.mulf %97, %75 : vector<8x128xf32>
    %107 = arith.mulf %91, %99 : vector<8x128xf32>
    %108 = arith.addf %106, %107 : vector<8x128xf32>
    %109 = math.tanh %108 : vector<8x128xf32>
    %110 = arith.mulf %105, %109 : vector<8x128xf32>
    %c3_i32 = arith.constant 3 : i32
    %c8_i32_33 = arith.constant 8 : i32
    %111 = arith.muli %c3_i32, %c8_i32_33 : i32
    %112 = tpu.assume_multiple %111, 8 : i32
    %113 = arith.index_cast %112 : i32 to index
    %c0_34 = arith.constant 0 : index
    %114 = vector.load %arg7[%113, %c0_34] : memref<64x512xf32, #tpu.memory_space<vmem>>, vector<8x512xf32>
    %115 = arith.truncf %110 : vector<8x128xf32> to vector<8x128xbf16>
    %c0_35 = arith.constant 0 : index
    %c0_36 = arith.constant 0 : index
    %116 = vector.load %arg3[%c0_35, %c0_36] : memref<128x512xbf16, #tpu.memory_space<vmem>>, vector<128x512xbf16>
    %cst_37 = arith.constant dense<0.000000e+00> : vector<8x512xf32>
    %117 = tpu.matmul %115, %116, %cst_37 {dimension_numbers = #tpu.dot_dimension_numbers<[1], [0], [0], [1], [0, 0, 1, 1], [], []>} : vector<8x128xbf16>, vector<128x512xbf16>, vector<8x512xf32> -> vector<8x512xf32>
    %118 = arith.addf %114, %117 : vector<8x512xf32>
    %119 = vector.extract_strided_slice %118 {offsets = [0, 0], sizes = [8, 128], strides = [1, 1]} : vector<8x512xf32> to vector<8x128xf32>
    %120 = arith.negf %119 : vector<8x128xf32>
    %121 = math.exp %120 : vector<8x128xf32>
    %cst_38 = arith.constant 1.000000e+00 : f32
    %122 = vector.broadcast %cst_38 : f32 to vector<8x128xf32>
    %123 = arith.addf %122, %121 : vector<8x128xf32>
    %124 = arith.divf %122, %123 : vector<8x128xf32>
    %125 = vector.extract_strided_slice %118 {offsets = [0, 128], sizes = [8, 128], strides = [1, 1]} : vector<8x512xf32> to vector<8x128xf32>
    %126 = arith.negf %125 : vector<8x128xf32>
    %127 = math.exp %126 : vector<8x128xf32>
    %cst_39 = arith.constant 1.000000e+00 : f32
    %128 = vector.broadcast %cst_39 : f32 to vector<8x128xf32>
    %129 = arith.addf %128, %127 : vector<8x128xf32>
    %130 = arith.divf %128, %129 : vector<8x128xf32>
    %131 = vector.extract_strided_slice %118 {offsets = [0, 256], sizes = [8, 128], strides = [1, 1]} : vector<8x512xf32> to vector<8x128xf32>
    %132 = math.tanh %131 : vector<8x128xf32>
    %133 = vector.extract_strided_slice %118 {offsets = [0, 384], sizes = [8, 128], strides = [1, 1]} : vector<8x512xf32> to vector<8x128xf32>
    %134 = arith.negf %133 : vector<8x128xf32>
    %135 = math.exp %134 : vector<8x128xf32>
    %cst_40 = arith.constant 1.000000e+00 : f32
    %136 = vector.broadcast %cst_40 : f32 to vector<8x128xf32>
    %137 = arith.addf %136, %135 : vector<8x128xf32>
    %138 = arith.divf %136, %137 : vector<8x128xf32>
    %139 = arith.mulf %130, %108 : vector<8x128xf32>
    %140 = arith.mulf %124, %132 : vector<8x128xf32>
    %141 = arith.addf %139, %140 : vector<8x128xf32>
    %142 = math.tanh %141 : vector<8x128xf32>
    %143 = arith.mulf %138, %142 : vector<8x128xf32>
    %c4_i32 = arith.constant 4 : i32
    %c8_i32_41 = arith.constant 8 : i32
    %144 = arith.muli %c4_i32, %c8_i32_41 : i32
    %145 = tpu.assume_multiple %144, 8 : i32
    %146 = arith.index_cast %145 : i32 to index
    %c0_42 = arith.constant 0 : index
    %147 = vector.load %arg7[%146, %c0_42] : memref<64x512xf32, #tpu.memory_space<vmem>>, vector<8x512xf32>
    %148 = arith.truncf %143 : vector<8x128xf32> to vector<8x128xbf16>
    %c0_43 = arith.constant 0 : index
    %c0_44 = arith.constant 0 : index
    %149 = vector.load %arg3[%c0_43, %c0_44] : memref<128x512xbf16, #tpu.memory_space<vmem>>, vector<128x512xbf16>
    %cst_45 = arith.constant dense<0.000000e+00> : vector<8x512xf32>
    %150 = tpu.matmul %148, %149, %cst_45 {dimension_numbers = #tpu.dot_dimension_numbers<[1], [0], [0], [1], [0, 0, 1, 1], [], []>} : vector<8x128xbf16>, vector<128x512xbf16>, vector<8x512xf32> -> vector<8x512xf32>
    %151 = arith.addf %147, %150 : vector<8x512xf32>
    %152 = vector.extract_strided_slice %151 {offsets = [0, 0], sizes = [8, 128], strides = [1, 1]} : vector<8x512xf32> to vector<8x128xf32>
    %153 = arith.negf %152 : vector<8x128xf32>
    %154 = math.exp %153 : vector<8x128xf32>
    %cst_46 = arith.constant 1.000000e+00 : f32
    %155 = vector.broadcast %cst_46 : f32 to vector<8x128xf32>
    %156 = arith.addf %155, %154 : vector<8x128xf32>
    %157 = arith.divf %155, %156 : vector<8x128xf32>
    %158 = vector.extract_strided_slice %151 {offsets = [0, 128], sizes = [8, 128], strides = [1, 1]} : vector<8x512xf32> to vector<8x128xf32>
    %159 = arith.negf %158 : vector<8x128xf32>
    %160 = math.exp %159 : vector<8x128xf32>
    %cst_47 = arith.constant 1.000000e+00 : f32
    %161 = vector.broadcast %cst_47 : f32 to vector<8x128xf32>
    %162 = arith.addf %161, %160 : vector<8x128xf32>
    %163 = arith.divf %161, %162 : vector<8x128xf32>
    %164 = vector.extract_strided_slice %151 {offsets = [0, 256], sizes = [8, 128], strides = [1, 1]} : vector<8x512xf32> to vector<8x128xf32>
    %165 = math.tanh %164 : vector<8x128xf32>
    %166 = vector.extract_strided_slice %151 {offsets = [0, 384], sizes = [8, 128], strides = [1, 1]} : vector<8x512xf32> to vector<8x128xf32>
    %167 = arith.negf %166 : vector<8x128xf32>
    %168 = math.exp %167 : vector<8x128xf32>
    %cst_48 = arith.constant 1.000000e+00 : f32
    %169 = vector.broadcast %cst_48 : f32 to vector<8x128xf32>
    %170 = arith.addf %169, %168 : vector<8x128xf32>
    %171 = arith.divf %169, %170 : vector<8x128xf32>
    %172 = arith.mulf %163, %141 : vector<8x128xf32>
    %173 = arith.mulf %157, %165 : vector<8x128xf32>
    %174 = arith.addf %172, %173 : vector<8x128xf32>
    %175 = math.tanh %174 : vector<8x128xf32>
    %176 = arith.mulf %171, %175 : vector<8x128xf32>
    %c5_i32 = arith.constant 5 : i32
    %c8_i32_49 = arith.constant 8 : i32
    %177 = arith.muli %c5_i32, %c8_i32_49 : i32
    %178 = tpu.assume_multiple %177, 8 : i32
    %179 = arith.index_cast %178 : i32 to index
    %c0_50 = arith.constant 0 : index
    %180 = vector.load %arg7[%179, %c0_50] : memref<64x512xf32, #tpu.memory_space<vmem>>, vector<8x512xf32>
    %181 = arith.truncf %176 : vector<8x128xf32> to vector<8x128xbf16>
    %c0_51 = arith.constant 0 : index
    %c0_52 = arith.constant 0 : index
    %182 = vector.load %arg3[%c0_51, %c0_52] : memref<128x512xbf16, #tpu.memory_space<vmem>>, vector<128x512xbf16>
    %cst_53 = arith.constant dense<0.000000e+00> : vector<8x512xf32>
    %183 = tpu.matmul %181, %182, %cst_53 {dimension_numbers = #tpu.dot_dimension_numbers<[1], [0], [0], [1], [0, 0, 1, 1], [], []>} : vector<8x128xbf16>, vector<128x512xbf16>, vector<8x512xf32> -> vector<8x512xf32>
    %184 = arith.addf %180, %183 : vector<8x512xf32>
    %185 = vector.extract_strided_slice %184 {offsets = [0, 0], sizes = [8, 128], strides = [1, 1]} : vector<8x512xf32> to vector<8x128xf32>
    %186 = arith.negf %185 : vector<8x128xf32>
    %187 = math.exp %186 : vector<8x128xf32>
    %cst_54 = arith.constant 1.000000e+00 : f32
    %188 = vector.broadcast %cst_54 : f32 to vector<8x128xf32>
    %189 = arith.addf %188, %187 : vector<8x128xf32>
    %190 = arith.divf %188, %189 : vector<8x128xf32>
    %191 = vector.extract_strided_slice %184 {offsets = [0, 128], sizes = [8, 128], strides = [1, 1]} : vector<8x512xf32> to vector<8x128xf32>
    %192 = arith.negf %191 : vector<8x128xf32>
    %193 = math.exp %192 : vector<8x128xf32>
    %cst_55 = arith.constant 1.000000e+00 : f32
    %194 = vector.broadcast %cst_55 : f32 to vector<8x128xf32>
    %195 = arith.addf %194, %193 : vector<8x128xf32>
    %196 = arith.divf %194, %195 : vector<8x128xf32>
    %197 = vector.extract_strided_slice %184 {offsets = [0, 256], sizes = [8, 128], strides = [1, 1]} : vector<8x512xf32> to vector<8x128xf32>
    %198 = math.tanh %197 : vector<8x128xf32>
    %199 = vector.extract_strided_slice %184 {offsets = [0, 384], sizes = [8, 128], strides = [1, 1]} : vector<8x512xf32> to vector<8x128xf32>
    %200 = arith.negf %199 : vector<8x128xf32>
    %201 = math.exp %200 : vector<8x128xf32>
    %cst_56 = arith.constant 1.000000e+00 : f32
    %202 = vector.broadcast %cst_56 : f32 to vector<8x128xf32>
    %203 = arith.addf %202, %201 : vector<8x128xf32>
    %204 = arith.divf %202, %203 : vector<8x128xf32>
    %205 = arith.mulf %196, %174 : vector<8x128xf32>
    %206 = arith.mulf %190, %198 : vector<8x128xf32>
    %207 = arith.addf %205, %206 : vector<8x128xf32>
    %208 = math.tanh %207 : vector<8x128xf32>
    %209 = arith.mulf %204, %208 : vector<8x128xf32>
    %c6_i32 = arith.constant 6 : i32
    %c8_i32_57 = arith.constant 8 : i32
    %210 = arith.muli %c6_i32, %c8_i32_57 : i32
    %211 = tpu.assume_multiple %210, 8 : i32
    %212 = arith.index_cast %211 : i32 to index
    %c0_58 = arith.constant 0 : index
    %213 = vector.load %arg7[%212, %c0_58] : memref<64x512xf32, #tpu.memory_space<vmem>>, vector<8x512xf32>
    %214 = arith.truncf %209 : vector<8x128xf32> to vector<8x128xbf16>
    %c0_59 = arith.constant 0 : index
    %c0_60 = arith.constant 0 : index
    %215 = vector.load %arg3[%c0_59, %c0_60] : memref<128x512xbf16, #tpu.memory_space<vmem>>, vector<128x512xbf16>
    %cst_61 = arith.constant dense<0.000000e+00> : vector<8x512xf32>
    %216 = tpu.matmul %214, %215, %cst_61 {dimension_numbers = #tpu.dot_dimension_numbers<[1], [0], [0], [1], [0, 0, 1, 1], [], []>} : vector<8x128xbf16>, vector<128x512xbf16>, vector<8x512xf32> -> vector<8x512xf32>
    %217 = arith.addf %213, %216 : vector<8x512xf32>
    %218 = vector.extract_strided_slice %217 {offsets = [0, 0], sizes = [8, 128], strides = [1, 1]} : vector<8x512xf32> to vector<8x128xf32>
    %219 = arith.negf %218 : vector<8x128xf32>
    %220 = math.exp %219 : vector<8x128xf32>
    %cst_62 = arith.constant 1.000000e+00 : f32
    %221 = vector.broadcast %cst_62 : f32 to vector<8x128xf32>
    %222 = arith.addf %221, %220 : vector<8x128xf32>
    %223 = arith.divf %221, %222 : vector<8x128xf32>
    %224 = vector.extract_strided_slice %217 {offsets = [0, 128], sizes = [8, 128], strides = [1, 1]} : vector<8x512xf32> to vector<8x128xf32>
    %225 = arith.negf %224 : vector<8x128xf32>
    %226 = math.exp %225 : vector<8x128xf32>
    %cst_63 = arith.constant 1.000000e+00 : f32
    %227 = vector.broadcast %cst_63 : f32 to vector<8x128xf32>
    %228 = arith.addf %227, %226 : vector<8x128xf32>
    %229 = arith.divf %227, %228 : vector<8x128xf32>
    %230 = vector.extract_strided_slice %217 {offsets = [0, 256], sizes = [8, 128], strides = [1, 1]} : vector<8x512xf32> to vector<8x128xf32>
    %231 = math.tanh %230 : vector<8x128xf32>
    %232 = vector.extract_strided_slice %217 {offsets = [0, 384], sizes = [8, 128], strides = [1, 1]} : vector<8x512xf32> to vector<8x128xf32>
    %233 = arith.negf %232 : vector<8x128xf32>
    %234 = math.exp %233 : vector<8x128xf32>
    %cst_64 = arith.constant 1.000000e+00 : f32
    %235 = vector.broadcast %cst_64 : f32 to vector<8x128xf32>
    %236 = arith.addf %235, %234 : vector<8x128xf32>
    %237 = arith.divf %235, %236 : vector<8x128xf32>
    %238 = arith.mulf %229, %207 : vector<8x128xf32>
    %239 = arith.mulf %223, %231 : vector<8x128xf32>
    %240 = arith.addf %238, %239 : vector<8x128xf32>
    %241 = math.tanh %240 : vector<8x128xf32>
    %242 = arith.mulf %237, %241 : vector<8x128xf32>
    %c7_i32 = arith.constant 7 : i32
    %c8_i32_65 = arith.constant 8 : i32
    %243 = arith.muli %c7_i32, %c8_i32_65 : i32
    %244 = tpu.assume_multiple %243, 8 : i32
    %245 = arith.index_cast %244 : i32 to index
    %c0_66 = arith.constant 0 : index
    %246 = vector.load %arg7[%245, %c0_66] : memref<64x512xf32, #tpu.memory_space<vmem>>, vector<8x512xf32>
    %247 = arith.truncf %242 : vector<8x128xf32> to vector<8x128xbf16>
    %c0_67 = arith.constant 0 : index
    %c0_68 = arith.constant 0 : index
    %248 = vector.load %arg3[%c0_67, %c0_68] : memref<128x512xbf16, #tpu.memory_space<vmem>>, vector<128x512xbf16>
    %cst_69 = arith.constant dense<0.000000e+00> : vector<8x512xf32>
    %249 = tpu.matmul %247, %248, %cst_69 {dimension_numbers = #tpu.dot_dimension_numbers<[1], [0], [0], [1], [0, 0, 1, 1], [], []>} : vector<8x128xbf16>, vector<128x512xbf16>, vector<8x512xf32> -> vector<8x512xf32>
    %250 = arith.addf %246, %249 : vector<8x512xf32>
    %251 = vector.extract_strided_slice %250 {offsets = [0, 0], sizes = [8, 128], strides = [1, 1]} : vector<8x512xf32> to vector<8x128xf32>
    %252 = arith.negf %251 : vector<8x128xf32>
    %253 = math.exp %252 : vector<8x128xf32>
    %cst_70 = arith.constant 1.000000e+00 : f32
    %254 = vector.broadcast %cst_70 : f32 to vector<8x128xf32>
    %255 = arith.addf %254, %253 : vector<8x128xf32>
    %256 = arith.divf %254, %255 : vector<8x128xf32>
    %257 = vector.extract_strided_slice %250 {offsets = [0, 128], sizes = [8, 128], strides = [1, 1]} : vector<8x512xf32> to vector<8x128xf32>
    %258 = arith.negf %257 : vector<8x128xf32>
    %259 = math.exp %258 : vector<8x128xf32>
    %cst_71 = arith.constant 1.000000e+00 : f32
    %260 = vector.broadcast %cst_71 : f32 to vector<8x128xf32>
    %261 = arith.addf %260, %259 : vector<8x128xf32>
    %262 = arith.divf %260, %261 : vector<8x128xf32>
    %263 = vector.extract_strided_slice %250 {offsets = [0, 256], sizes = [8, 128], strides = [1, 1]} : vector<8x512xf32> to vector<8x128xf32>
    %264 = math.tanh %263 : vector<8x128xf32>
    %265 = vector.extract_strided_slice %250 {offsets = [0, 384], sizes = [8, 128], strides = [1, 1]} : vector<8x512xf32> to vector<8x128xf32>
    %266 = arith.negf %265 : vector<8x128xf32>
    %267 = math.exp %266 : vector<8x128xf32>
    %cst_72 = arith.constant 1.000000e+00 : f32
    %268 = vector.broadcast %cst_72 : f32 to vector<8x128xf32>
    %269 = arith.addf %268, %267 : vector<8x128xf32>
    %270 = arith.divf %268, %269 : vector<8x128xf32>
    %271 = arith.mulf %262, %240 : vector<8x128xf32>
    %272 = arith.mulf %256, %264 : vector<8x128xf32>
    %273 = arith.addf %271, %272 : vector<8x128xf32>
    %274 = math.tanh %273 : vector<8x128xf32>
    %275 = arith.mulf %270, %274 : vector<8x128xf32>
    %c7_i32_73 = arith.constant 7 : i32
    %c56 = arith.constant 56 : index
    %c0_74 = arith.constant 0 : index
    %276 = vector.load %arg7[%c56, %c0_74] : memref<64x512xf32, #tpu.memory_space<vmem>>, vector<8x512xf32>
    %277 = arith.truncf %275 : vector<8x128xf32> to vector<8x128xbf16>
    %c0_75 = arith.constant 0 : index
    %c0_76 = arith.constant 0 : index
    %278 = vector.load %arg3[%c0_75, %c0_76] : memref<128x512xbf16, #tpu.memory_space<vmem>>, vector<128x512xbf16>
    %cst_77 = arith.constant dense<0.000000e+00> : vector<8x512xf32>
    %279 = tpu.matmul %277, %278, %cst_77 {dimension_numbers = #tpu.dot_dimension_numbers<[1], [0], [0], [1], [0, 0, 1, 1], [], []>} : vector<8x128xbf16>, vector<128x512xbf16>, vector<8x512xf32> -> vector<8x512xf32>
    %280 = arith.addf %276, %279 : vector<8x512xf32>
    %281 = vector.extract_strided_slice %280 {offsets = [0, 0], sizes = [8, 128], strides = [1, 1]} : vector<8x512xf32> to vector<8x128xf32>
    %282 = arith.negf %281 : vector<8x128xf32>
    %283 = math.exp %282 : vector<8x128xf32>
    %cst_78 = arith.constant 1.000000e+00 : f32
    %284 = vector.broadcast %cst_78 : f32 to vector<8x128xf32>
    %285 = arith.addf %284, %283 : vector<8x128xf32>
    %286 = arith.divf %284, %285 : vector<8x128xf32>
    %287 = vector.extract_strided_slice %280 {offsets = [0, 128], sizes = [8, 128], strides = [1, 1]} : vector<8x512xf32> to vector<8x128xf32>
    %288 = arith.negf %287 : vector<8x128xf32>
    %289 = math.exp %288 : vector<8x128xf32>
    %cst_79 = arith.constant 1.000000e+00 : f32
    %290 = vector.broadcast %cst_79 : f32 to vector<8x128xf32>
    %291 = arith.addf %290, %289 : vector<8x128xf32>
    %292 = arith.divf %290, %291 : vector<8x128xf32>
    %293 = vector.extract_strided_slice %280 {offsets = [0, 256], sizes = [8, 128], strides = [1, 1]} : vector<8x512xf32> to vector<8x128xf32>
    %294 = math.tanh %293 : vector<8x128xf32>
    %295 = vector.extract_strided_slice %280 {offsets = [0, 384], sizes = [8, 128], strides = [1, 1]} : vector<8x512xf32> to vector<8x128xf32>
    %296 = arith.negf %295 : vector<8x128xf32>
    %297 = math.exp %296 : vector<8x128xf32>
    %cst_80 = arith.constant 1.000000e+00 : f32
    %298 = vector.broadcast %cst_80 : f32 to vector<8x128xf32>
    %299 = arith.addf %298, %297 : vector<8x128xf32>
    %300 = arith.divf %298, %299 : vector<8x128xf32>
    %301 = arith.mulf %292, %273 : vector<8x128xf32>
    %302 = arith.mulf %286, %294 : vector<8x128xf32>
    %303 = arith.addf %301, %302 : vector<8x128xf32>
    %304 = math.tanh %303 : vector<8x128xf32>
    %305 = arith.mulf %300, %304 : vector<8x128xf32>
    %306 = arith.truncf %305 : vector<8x128xf32> to vector<8x128xbf16>
    %c0_81 = arith.constant 0 : index
    %c0_82 = arith.constant 0 : index
    %307 = vector.load %arg4[%c0_81, %c0_82] : memref<128x128xbf16, #tpu.memory_space<vmem>>, vector<128x128xbf16>
    %cst_83 = arith.constant dense<0.000000e+00> : vector<8x128xf32>
    %308 = tpu.matmul %306, %307, %cst_83 {dimension_numbers = #tpu.dot_dimension_numbers<[1], [0], [0], [1], [0, 0, 1, 1], [], []>} : vector<8x128xbf16>, vector<128x128xbf16>, vector<8x128xf32> -> vector<8x128xf32>
    %c0_84 = arith.constant 0 : index
    %c0_85 = arith.constant 0 : index
    %309 = vector.load %arg5[%c0_84, %c0_85] : memref<1x128xf32, #tpu.memory_space<vmem>>, vector<1x128xf32>
    %310 = vector.broadcast %309 : vector<1x128xf32> to vector<8x128xf32>
    %311 = arith.addf %308, %310 : vector<8x128xf32>
    %c0_86 = arith.constant 0 : index
    %c0_87 = arith.constant 0 : index
    %312 = vector.load %arg6[%c0_86, %c0_87] : memref<8x128xf32, #tpu.memory_space<vmem>>, vector<8x128xf32>
    tpu.vector_store %arg6[%c0_86, %c0_87], %311 {strides = array<i32>} : memref<8x128xf32, #tpu.memory_space<vmem>>, vector<8x128xf32>,
    return
  }
}

</mosaic_0001>

<llo_original>
// kernel: tpu_custom_call.1
$region0: #{tpu_custom_call.1}
  #allocation0 [shape = 'u32[]', space=smem, size = 0x4, offset = 0x4, fixed_abs, tag = 'smem constant byte address 0x4 - core index']
  #allocation1 [shape = 'u32[144,128]{1,0:T(1,128)}', space=vmem, size = 0x12000, scoped, tag = 'internal scratch']
  #allocation2 [shape = 'f32[64,512]{1,0:T(8,128)}', space=vmem, size = 0x20000, scoped, tag = 'scratch operand']
  %s0 = inlined_call_operand.vmem [shape: bf16[64,16], index: 0, kind: input, shape index: {}]
  %s1 = inlined_call_operand.vmem [shape: bf16[16,512], index: 1, kind: input, shape index: {}]
  %s2 = inlined_call_operand.vmem [shape: f32[1,512], index: 2, kind: input, shape index: {}]
  %s3 = inlined_call_operand.hbm [shape: bf16[128,512], index: 3, kind: input, shape index: {}]
  %s4 = inlined_call_operand.hbm [shape: bf16[128,128], index: 4, kind: input, shape index: {}]
  %s5 = inlined_call_operand.vmem [shape: f32[1,128], index: 5, kind: input, shape index: {}]
  %s6 = inlined_call_operand.hbm [shape: f32[8,128], index: 6, kind: output, shape index: {}]
  %s7 = sld [smem:[#allocation0]]
  $region42: #{tpu_custom_call.1} parent=0
    _
  %s9 = ssub.s32 1, %s7
  %s10 = scalar_select 0, %s9, %s7
  $region1: #{tpu_custom_call.1} parent=0
    #allocation3 [shape = 'u8[131072]{0}', space=vmem, size = 0x20000, scoped, tag = 'input window, operand 3, single buffered']
    #allocation4 [shape = 's32[1]{0}', space=sflag, size = 0x4, scoped, tag = 'scoped memory for tpu_custom_call.1']
    #allocation5 [shape = 's32[1]{0}', space=sflag, size = 0x4, scoped, tag = 'scoped memory for tpu_custom_call.1']
    #allocation6 [shape = 'u8[32768]{0}', space=vmem, size = 0x8000, scoped, tag = 'input window, operand 4, single buffered']
    #allocation7 [shape = 's32[1]{0}', space=sflag, size = 0x4, scoped, tag = 'scoped memory for tpu_custom_call.1']
    #allocation8 [shape = 'u8[4096]{0}', space=vmem, size = 0x1000, scoped, tag = 'output window, operand 0, single buffered']
    %11 = vsyncpa [#allocation4], 0
    %12 = vsyncpa [#allocation7], 0
    %13 = vsyncpa [#allocation5], 0
    // Predicated region
    $region2: #{tpu_custom_call.1} parent=1 // pred_check
      _
    $region3: #{tpu_custom_call.1} parent=1 // pred_check_branch
      %15 = sbr.rel (0) target = $region5
    $region4: #{tpu_custom_call.1} parent=1 // pred_region
      _
    $region5: #{tpu_custom_call.1} parent=1 // pred_fallthru
      _
    // Predicated region
    $region6: #{tpu_custom_call.1} parent=1 // pred_check
      _
    $region7: #{tpu_custom_call.1} parent=1 // pred_check_branch
      %17 = sbr.rel (0) target = $region9
    $region8: #{tpu_custom_call.1} parent=1 // pred_region
      _
    $region9: #{tpu_custom_call.1} parent=1 // pred_fallthru
      _
    // Predicated region
    $region10: #{tpu_custom_call.1} parent=1 // pred_check
      _
    $region11: #{tpu_custom_call.1} parent=1 // pred_check_branch
      %19 = sbr.rel (0) target = $region13
    $region12: #{tpu_custom_call.1} parent=1 // pred_region
      _
    $region13: #{tpu_custom_call.1} parent=1 // pred_fallthru
      _
    // Predicated region
    $region14: #{tpu_custom_call.1} parent=1 // pred_check
      _
    $region15: #{tpu_custom_call.1} parent=1 // pred_check_branch
      %21 = sbr.rel (0) target = $region17
    $region16: #{tpu_custom_call.1} parent=1 // pred_region
      %s23 = ssub.s32 4096, 4096
      %24 = vsyncadd [#allocation4], %s23
      %s25 = sshll.u32 [#allocation3], 4
      %s26 = int_to_ptr.vmem [resolvable:$true] %s25
      %31 = dma.hbm_to_vmem [thread:$0]  %s3, 4096, %s26, [#allocation4], 256, 256, 16
    $region17: #{tpu_custom_call.1} parent=1 // pred_fallthru
      _
    // Predicated region
    $region18: #{tpu_custom_call.1} parent=1 // pred_check
      _
    $region19: #{tpu_custom_call.1} parent=1 // pred_check_branch
      %33 = sbr.rel (0) target = $region21
    $region20: #{tpu_custom_call.1} parent=1 // pred_region
      %s35 = ssub.s32 1024, 1024
      %36 = vsyncadd [#allocation7], %s35
      %s37 = sshll.u32 [#allocation6], 4
      %s38 = int_to_ptr.vmem [resolvable:$true] %s37
      %43 = dma.hbm_to_vmem [thread:$0]  %s4, 1024, %s38, [#allocation7], 64, 64, 4
    $region21: #{tpu_custom_call.1} parent=1 // pred_fallthru
      _
    // Predicated region
    $region22: #{tpu_custom_call.1} parent=1 // pred_check
      _
    $region23: #{tpu_custom_call.1} parent=1 // pred_check_branch
      %45 = sbr.rel (0) target = $region25
    $region24: #{tpu_custom_call.1} parent=1 // pred_region
      _
    $region25: #{tpu_custom_call.1} parent=1 // pred_fallthru
      _
    // Predicated region
    $region26: #{tpu_custom_call.1} parent=1 // pred_check
      _
    $region27: #{tpu_custom_call.1} parent=1 // pred_check_branch
      %47 = sbr.rel (0) target = $region29
    $region28: #{tpu_custom_call.1} parent=1 // pred_region
      %48 = dma.done [#allocation4], 4096
    $region29: #{tpu_custom_call.1} parent=1 // pred_fallthru
      _
    // Predicated region
    $region30: #{tpu_custom_call.1} parent=1 // pred_check
      _
    $region31: #{tpu_custom_call.1} parent=1 // pred_check_branch
      %50 = sbr.rel (0) target = $region33
    $region32: #{tpu_custom_call.1} parent=1 // pred_region
      %51 = dma.done [#allocation7], 1024
    $region33: #{tpu_custom_call.1} parent=1 // pred_fallthru
      _
    %v53 = vld [vmem:[%s0] sm:$0xf]
    %v54 = vld [vmem:[%s0 + $0x4] sm:$0xf]
    %v55 = vld [vmem:[%s0 + $0x8] sm:$0xf]
    %v56 = vld [vmem:[%s0 + $0xc] sm:$0xf]
    %v57 = vld [vmem:[%s0 + $0x10] sm:$0xf]
    %v58 = vld [vmem:[%s0 + $0x14] sm:$0xf]
    %v59 = vld [vmem:[%s0 + $0x18] sm:$0xf]
    %v60 = vld [vmem:[%s0 + $0x1c] sm:$0xf]
    %v61 = vld [vmem:[%s1] sm:$0xff]
    %v62 = vld [vmem:[%s1 + $0x8] sm:$0xff]
    %v63 = vld [vmem:[%s1 + $0x10] sm:$0xff]
    %v64 = vld [vmem:[%s1 + $0x18] sm:$0xff]
    %v65 = vld [vmem:[%s2] sm:$0xf]
    %v67 = vlaneseq
    %v68 = vshrl.u32 %v67, 7
    %v69 = vsub.s32 0, %v68
    %v70 = vrot.slane %v65, %v69
    %v71 = vlaneseq
    %v72 = vshrl.u32 %v71, 7
    %v73 = vsub.s32 1, %v72
    %v74 = vrot.slane %v65, %v73
    %v75 = vlaneseq
    %v76 = vshrl.u32 %v75, 7
    %v77 = vsub.s32 2, %v76
    %v78 = vrot.slane %v65, %v77
    %v79 = vlaneseq
    %v80 = vshrl.u32 %v79, 7
    %v81 = vsub.s32 3, %v80
    %v82 = vrot.slane %v65, %v81
    %v95 = vunpack.c.l.b16 %v53
    %v96 = vunpack.c.l.b16 %v54
    %v97 = vunpack.c.l.b16 %v55
    %v98 = vunpack.c.l.b16 %v56
    %v99 = vunpack.c.l.b16 %v57
    %v100 = vunpack.c.l.b16 %v58
    %v101 = vunpack.c.l.b16 %v59
    %v102 = vunpack.c.l.b16 %v60
    %v103 = vpack.c.b16 %v96, %v95
    %v104 = vpack.c.b16 %v98, %v97
    %v105 = vpack.c.b16 %v100, %v99
    %v106 = vpack.c.b16 %v102, %v101
    %v111 = vunpack.c.l.b16 %v61
    %v112 = vunpack.c.h.b16 %v61
    %v113 = vunpack.c.l.b16 %v62
    %v114 = vunpack.c.h.b16 %v62
    %v115 = vunpack.c.l.b16 %v63
    %v116 = vunpack.c.h.b16 %v63
    %v117 = vunpack.c.l.b16 %v64
    %v118 = vunpack.c.h.b16 %v64
    %v119 = vpack.c.b16 %v115, %v111
    %v120 = vpack.c.b16 %v116, %v112
    %v121 = vpack.c.b16 %v117, %v113
    %v122 = vpack.c.b16 %v118, %v114
    %vm127 = vcmask 130048
    %v129 = vsel %vm127, %v103, 0
    %v132 = vsel %vm127, %v104, 0
    %v135 = vsel %vm127, %v105, 0
    %v138 = vsel %vm127, %v106, 0
    %140 = vmatprep.subr.bf16.mxu0 %v120
    %141 = vmatpush1.bf16.msra.mxu0 %v119
    %142 = vmatprep.subr.bf16.mxu0 0
    %143 = vmatpush1.bf16.msra.mxu0 0
    %144 = vmatprep.subr.bf16.mxu0 0
    %145 = vmatpush1.bf16.msra.mxu0 0
    %146 = vmatprep.subr.bf16.mxu0 0
    %147 = vmatpush1.bf16.msra.mxu0 0
    %148 = vmatprep.subr.bf16.mxu0 0
    %149 = vmatpush1.bf16.msra.mxu0 0
    %150 = vmatprep.subr.bf16.mxu0 0
    %151 = vmatpush1.bf16.msra.mxu0 0
    %152 = vmatprep.subr.bf16.mxu0 0
    %153 = vmatpush1.bf16.msra.mxu0 0
    %154 = vmatprep.subr.bf16.mxu0 0
    %155 = vmatpush1.bf16.msra.mxu0 0
    %156 = vmatprep.subr.bf16.mxu0 0
    %157 = vmatpush1.bf16.msra.mxu0 0
    %158 = vmatprep.subr.bf16.mxu0 0
    %159 = vmatpush1.bf16.msra.mxu0 0
    %160 = vmatprep.subr.bf16.mxu0 0
    %161 = vmatpush1.bf16.msra.mxu0 0
    %162 = vmatprep.subr.bf16.mxu0 0
    %163 = vmatpush1.bf16.msra.mxu0 0
    %164 = vmatprep.subr.bf16.mxu0 0
    %165 = vmatpush1.bf16.msra.mxu0 0
    %166 = vmatprep.subr.bf16.mxu0 0
    %167 = vmatpush1.bf16.msra.mxu0 0
    %168 = vmatprep.subr.bf16.mxu0 0
    %169 = vmatpush1.bf16.msra.mxu0 0
    %170 = vmatprep.subr.bf16.mxu0 0
    %171 = vmatpush1.bf16.msra.mxu0 0
    %172 = vmatprep.mubr.bf16.mxu0 0
    %173 = vmatmul.mubr.bf16.gmra.mrb[0].mxu0 %v129
    %v174 = vpop.f32.mrb[0].mxu0
    %v175 = vadd.f32 %v70, %v174
    %v176 = vpop.f32.mrb[0].mxu0
    %v177 = vadd.f32 %v74, %v176
    %v178 = vpop.f32.mrb[0].mxu0
    %v179 = vadd.f32 %v70, %v178
    %v180 = vpop.f32.mrb[0].mxu0
    %v181 = vadd.f32 %v74, %v180
    %182 = vmatprep.mubr.bf16.mxu0 0
    %183 = vmatmul.mubr.bf16.gmra.mrb[0].mxu0 %v132
    %v184 = vpop.f32.mrb[0].mxu0
    %v185 = vadd.f32 %v70, %v184
    %v186 = vpop.f32.mrb[0].mxu0
    %v187 = vadd.f32 %v74, %v186
    %v188 = vpop.f32.mrb[0].mxu0
    %v189 = vadd.f32 %v70, %v188
    %v190 = vpop.f32.mrb[0].mxu0
    %v191 = vadd.f32 %v74, %v190
    %192 = vmatprep.mubr.bf16.mxu0 0
    %193 = vmatmul.mubr.bf16.gmra.mrb[0].mxu0 %v135
    %v194 = vpop.f32.mrb[0].mxu0
    %v195 = vadd.f32 %v70, %v194
    %v196 = vpop.f32.mrb[0].mxu0
    %v197 = vadd.f32 %v74, %v196
    %v198 = vpop.f32.mrb[0].mxu0
    %v199 = vadd.f32 %v70, %v198
    %v200 = vpop.f32.mrb[0].mxu0
    %v201 = vadd.f32 %v74, %v200
    %202 = vmatprep.mubr.bf16.mxu0 0
    %203 = vmatmul.mubr.bf16.gmra.mrb[0].mxu0 %v138
    %v204 = vpop.f32.mrb[0].mxu0
    %v205 = vadd.f32 %v70, %v204
    %v206 = vpop.f32.mrb[0].mxu0
    %v207 = vadd.f32 %v74, %v206
    %v208 = vpop.f32.mrb[0].mxu0
    %v209 = vadd.f32 %v70, %v208
    %v210 = vpop.f32.mrb[0].mxu0
    %v211 = vadd.f32 %v74, %v210
    %212 = vdwg.mxu0
    %213 = vmatprep.subr.bf16.mxu0 %v122
    %214 = vmatpush1.bf16.msra.mxu0 %v121
    %215 = vmatprep.subr.bf16.mxu0 0
    %216 = vmatpush1.bf16.msra.mxu0 0
    %217 = vmatprep.subr.bf16.mxu0 0
    %218 = vmatpush1.bf16.msra.mxu0 0
    %219 = vmatprep.subr.bf16.mxu0 0
    %220 = vmatpush1.bf16.msra.mxu0 0
    %221 = vmatprep.subr.bf16.mxu0 0
    %222 = vmatpush1.bf16.msra.mxu0 0
    %223 = vmatprep.subr.bf16.mxu0 0
    %224 = vmatpush1.bf16.msra.mxu0 0
    %225 = vmatprep.subr.bf16.mxu0 0
    %226 = vmatpush1.bf16.msra.mxu0 0
    %227 = vmatprep.subr.bf16.mxu0 0
    %228 = vmatpush1.bf16.msra.mxu0 0
    %229 = vmatprep.subr.bf16.mxu0 0
    %230 = vmatpush1.bf16.msra.mxu0 0
    %231 = vmatprep.subr.bf16.mxu0 0
    %232 = vmatpush1.bf16.msra.mxu0 0
    %233 = vmatprep.subr.bf16.mxu0 0
    %234 = vmatpush1.bf16.msra.mxu0 0
    %235 = vmatprep.subr.bf16.mxu0 0
    %236 = vmatpush1.bf16.msra.mxu0 0
    %237 = vmatprep.subr.bf16.mxu0 0
    %238 = vmatpush1.bf16.msra.mxu0 0
    %239 = vmatprep.subr.bf16.mxu0 0
    %240 = vmatpush1.bf16.msra.mxu0 0
    %241 = vmatprep.subr.bf16.mxu0 0
    %242 = vmatpush1.bf16.msra.mxu0 0
    %243 = vmatprep.subr.bf16.mxu0 0
    %244 = vmatpush1.bf16.msra.mxu0 0
    %245 = vmatprep.mubr.bf16.mxu0 0
    %246 = vmatmul.mubr.bf16.gmra.mrb[0].mxu0 %v129
    %v247 = vpop.f32.mrb[0].mxu0
    %v248 = vadd.f32 %v78, %v247
    %v249 = vpop.f32.mrb[0].mxu0
    %v250 = vadd.f32 %v82, %v249
    %v251 = vpop.f32.mrb[0].mxu0
    %v252 = vadd.f32 %v78, %v251
    %v253 = vpop.f32.mrb[0].mxu0
    %v254 = vadd.f32 %v82, %v253
    %255 = vmatprep.mubr.bf16.mxu0 0
    %256 = vmatmul.mubr.bf16.gmra.mrb[0].mxu0 %v132
    %v257 = vpop.f32.mrb[0].mxu0
    %v258 = vadd.f32 %v78, %v257
    %v259 = vpop.f32.mrb[0].mxu0
    %v260 = vadd.f32 %v82, %v259
    %v261 = vpop.f32.mrb[0].mxu0
    %v262 = vadd.f32 %v78, %v261
    %v263 = vpop.f32.mrb[0].mxu0
    %v264 = vadd.f32 %v82, %v263
    %265 = vmatprep.mubr.bf16.mxu0 0
    %266 = vmatmul.mubr.bf16.gmra.mrb[0].mxu0 %v135
    %v267 = vpop.f32.mrb[0].mxu0
    %v268 = vadd.f32 %v78, %v267
    %v269 = vpop.f32.mrb[0].mxu0
    %v270 = vadd.f32 %v82, %v269
    %v271 = vpop.f32.mrb[0].mxu0
    %v272 = vadd.f32 %v78, %v271
    %v273 = vpop.f32.mrb[0].mxu0
    %v274 = vadd.f32 %v82, %v273
    %275 = vmatprep.mubr.bf16.mxu0 0
    %276 = vmatmul.mubr.bf16.gmra.mrb[0].mxu0 %v138
    %v277 = vpop.f32.mrb[0].mxu0
    %v278 = vadd.f32 %v78, %v277
    %v279 = vpop.f32.mrb[0].mxu0
    %v280 = vadd.f32 %v82, %v279
    %v281 = vpop.f32.mrb[0].mxu0
    %v282 = vadd.f32 %v78, %v281
    %v283 = vpop.f32.mrb[0].mxu0
    %v284 = vadd.f32 %v82, %v283
    %285 = vdwg.mxu0
    %286 = vst [vmem:[#allocation2] sm:$0xff] %v175
    %287 = vst [vmem:[#allocation2 + $0x8] sm:$0xff] %v177
    %288 = vst [vmem:[#allocation2 + $0x10] sm:$0xff] %v248
    %289 = vst [vmem:[#allocation2 + $0x18] sm:$0xff] %v250
    %290 = vst [vmem:[#allocation2 + $0x20] sm:$0xff] %v179
    %291 = vst [vmem:[#allocation2 + $0x28] sm:$0xff] %v181
    %292 = vst [vmem:[#allocation2 + $0x30] sm:$0xff] %v252
    %293 = vst [vmem:[#allocation2 + $0x38] sm:$0xff] %v254
    %294 = vst [vmem:[#allocation2 + $0x40] sm:$0xff] %v185
    %295 = vst [vmem:[#allocation2 + $0x48] sm:$0xff] %v187
    %296 = vst [vmem:[#allocation2 + $0x50] sm:$0xff] %v258
    %297 = vst [vmem:[#allocation2 + $0x58] sm:$0xff] %v260
    %298 = vst [vmem:[#allocation2 + $0x60] sm:$0xff] %v189
    %299 = vst [vmem:[#allocation2 + $0x68] sm:$0xff] %v191
    %300 = vst [vmem:[#allocation2 + $0x70] sm:$0xff] %v262
    %301 = vst [vmem:[#allocation2 + $0x78] sm:$0xff] %v264
    %302 = vst [vmem:[#allocation2 + $0x80] sm:$0xff] %v195
    %303 = vst [vmem:[#allocation2 + $0x88] sm:$0xff] %v197
    %304 = vst [vmem:[#allocation2 + $0x90] sm:$0xff] %v268
    %305 = vst [vmem:[#allocation2 + $0x98] sm:$0xff] %v270
    %306 = vst [vmem:[#allocation2 + $0xa0] sm:$0xff] %v199
    %307 = vst [vmem:[#allocation2 + $0xa8] sm:$0xff] %v201
    %308 = vst [vmem:[#allocation2 + $0xb0] sm:$0xff] %v272
    %309 = vst [vmem:[#allocation2 + $0xb8] sm:$0xff] %v274
    %310 = vst [vmem:[#allocation2 + $0xc0] sm:$0xff] %v205
    %311 = vst [vmem:[#allocation2 + $0xc8] sm:$0xff] %v207
    %312 = vst [vmem:[#allocation2 + $0xd0] sm:$0xff] %v278
    %313 = vst [vmem:[#allocation2 + $0xd8] sm:$0xff] %v280
    %314 = vst [vmem:[#allocation2 + $0xe0] sm:$0xff] %v209
    %315 = vst [vmem:[#allocation2 + $0xe8] sm:$0xff] %v211
    %316 = vst [vmem:[#allocation2 + $0xf0] sm:$0xff] %v282
    %317 = vst [vmem:[#allocation2 + $0xf8] sm:$0xff] %v284
    %v318 = vld [vmem:[#allocation2] sm:$0xff]
    %v319 = vld [vmem:[#allocation2 + $0x8] sm:$0xff]
    %v320 = vld [vmem:[#allocation2 + $0x10] sm:$0xff]
    %v321 = vld [vmem:[#allocation2 + $0x18] sm:$0xff]
    %v322 = vld [vmem:[#allocation3] sm:$0xff]
    %v323 = vld [vmem:[#allocation3 + $0x8] sm:$0xff]
    %v324 = vld [vmem:[#allocation3 + $0x10] sm:$0xff]
    %v325 = vld [vmem:[#allocation3 + $0x18] sm:$0xff]
    %v326 = vld [vmem:[#allocation3 + $0x20] sm:$0xff]
    %v327 = vld [vmem:[#allocation3 + $0x28] sm:$0xff]
    %v328 = vld [vmem:[#allocation3 + $0x30] sm:$0xff]
    %v329 = vld [vmem:[#allocation3 + $0x38] sm:$0xff]
    %v330 = vld [vmem:[#allocation3 + $0x40] sm:$0xff]
    %v331 = vld [vmem:[#allocation3 + $0x48] sm:$0xff]
    %v332 = vld [vmem:[#allocation3 + $0x50] sm:$0xff]
    %v333 = vld [vmem:[#allocation3 + $0x58] sm:$0xff]
    %v334 = vld [vmem:[#allocation3 + $0x60] sm:$0xff]
    %v335 = vld [vmem:[#allocation3 + $0x68] sm:$0xff]
    %v336 = vld [vmem:[#allocation3 + $0x70] sm:$0xff]
    %v337 = vld [vmem:[#allocation3 + $0x78] sm:$0xff]
    %v338 = vld [vmem:[#allocation3 + $0x80] sm:$0xff]
    %v339 = vld [vmem:[#allocation3 + $0x88] sm:$0xff]
    %v340 = vld [vmem:[#allocation3 + $0x90] sm:$0xff]
    %v341 = vld [vmem:[#allocation3 + $0x98] sm:$0xff]
    %v342 = vld [vmem:[#allocation3 + $0xa0] sm:$0xff]
    %v343 = vld [vmem:[#allocation3 + $0xa8] sm:$0xff]
    %v344 = vld [vmem:[#allocation3 + $0xb0] sm:$0xff]
    %v345 = vld [vmem:[#allocation3 + $0xb8] sm:$0xff]
    %v346 = vld [vmem:[#allocation3 + $0xc0] sm:$0xff]
    %v347 = vld [vmem:[#allocation3 + $0xc8] sm:$0xff]
    %v348 = vld [vmem:[#allocation3 + $0xd0] sm:$0xff]
    %v349 = vld [vmem:[#allocation3 + $0xd8] sm:$0xff]
    %v350 = vld [vmem:[#allocation3 + $0xe0] sm:$0xff]
    %v351 = vld [vmem:[#allocation3 + $0xe8] sm:$0xff]
    %v352 = vld [vmem:[#allocation3 + $0xf0] sm:$0xff]
    %v353 = vld [vmem:[#allocation3 + $0xf8] sm:$0xff]
    %v386 = vunpack.c.l.b16 %v322
    %v387 = vunpack.c.h.b16 %v322
    %v388 = vunpack.c.l.b16 %v323
    %v389 = vunpack.c.h.b16 %v323
    %v390 = vunpack.c.l.b16 %v324
    %v391 = vunpack.c.h.b16 %v324
    %v392 = vunpack.c.l.b16 %v325
    %v393 = vunpack.c.h.b16 %v325
    %v394 = vunpack.c.l.b16 %v326
    %v395 = vunpack.c.h.b16 %v326
    %v396 = vunpack.c.l.b16 %v327
    %v397 = vunpack.c.h.b16 %v327
    %v398 = vunpack.c.l.b16 %v328
    %v399 = vunpack.c.h.b16 %v328
    %v400 = vunpack.c.l.b16 %v329
    %v401 = vunpack.c.h.b16 %v329
    %v402 = vunpack.c.l.b16 %v330
    %v403 = vunpack.c.h.b16 %v330
    %v404 = vunpack.c.l.b16 %v331
    %v405 = vunpack.c.h.b16 %v331
    %v406 = vunpack.c.l.b16 %v332
    %v407 = vunpack.c.h.b16 %v332
    %v408 = vunpack.c.l.b16 %v333
    %v409 = vunpack.c.h.b16 %v333
    %v410 = vunpack.c.l.b16 %v334
    %v411 = vunpack.c.h.b16 %v334
    %v412 = vunpack.c.l.b16 %v335
    %v413 = vunpack.c.h.b16 %v335
    %v414 = vunpack.c.l.b16 %v336
    %v415 = vunpack.c.h.b16 %v336
    %v416 = vunpack.c.l.b16 %v337
    %v417 = vunpack.c.h.b16 %v337
    %v418 = vunpack.c.l.b16 %v338
    %v419 = vunpack.c.h.b16 %v338
    %v420 = vunpack.c.l.b16 %v339
    %v421 = vunpack.c.h.b16 %v339
    %v422 = vunpack.c.l.b16 %v340
    %v423 = vunpack.c.h.b16 %v340
    %v424 = vunpack.c.l.b16 %v341
    %v425 = vunpack.c.h.b16 %v341
    %v426 = vunpack.c.l.b16 %v342
    %v427 = vunpack.c.h.b16 %v342
    %v428 = vunpack.c.l.b16 %v343
    %v429 = vunpack.c.h.b16 %v343
    %v430 = vunpack.c.l.b16 %v344
    %v431 = vunpack.c.h.b16 %v344
    %v432 = vunpack.c.l.b16 %v345
    %v433 = vunpack.c.h.b16 %v345
    %v434 = vunpack.c.l.b16 %v346
    %v435 = vunpack.c.h.b16 %v346
    %v436 = vunpack.c.l.b16 %v347
    %v437 = vunpack.c.h.b16 %v347
    %v438 = vunpack.c.l.b16 %v348
    %v439 = vunpack.c.h.b16 %v348
    %v440 = vunpack.c.l.b16 %v349
    %v441 = vunpack.c.h.b16 %v349
    %v442 = vunpack.c.l.b16 %v350
    %v443 = vunpack.c.h.b16 %v350
    %v444 = vunpack.c.l.b16 %v351
    %v445 = vunpack.c.h.b16 %v351
    %v446 = vunpack.c.l.b16 %v352
    %v447 = vunpack.c.h.b16 %v352
    %v448 = vunpack.c.l.b16 %v353
    %v449 = vunpack.c.h.b16 %v353
    %v450 = vpack.c.b16 %v390, %v386
    %v451 = vpack.c.b16 %v391, %v387
    %v452 = vpack.c.b16 %v392, %v388
    %v453 = vpack.c.b16 %v393, %v389
    %v454 = vpack.c.b16 %v398, %v394
    %v455 = vpack.c.b16 %v399, %v395
    %v456 = vpack.c.b16 %v400, %v396
    %v457 = vpack.c.b16 %v401, %v397
    %v458 = vpack.c.b16 %v406, %v402
    %v459 = vpack.c.b16 %v407, %v403
    %v460 = vpack.c.b16 %v408, %v404
    %v461 = vpack.c.b16 %v409, %v405
    %v462 = vpack.c.b16 %v414, %v410
    %v463 = vpack.c.b16 %v415, %v411
    %v464 = vpack.c.b16 %v416, %v412
    %v465 = vpack.c.b16 %v417, %v413
    %v466 = vpack.c.b16 %v422, %v418
    %v467 = vpack.c.b16 %v423, %v419
    %v468 = vpack.c.b16 %v424, %v420
    %v469 = vpack.c.b16 %v425, %v421
    %v470 = vpack.c.b16 %v430, %v426
    %v471 = vpack.c.b16 %v431, %v427
    %v472 = vpack.c.b16 %v432, %v428
    %v473 = vpack.c.b16 %v433, %v429
    %v474 = vpack.c.b16 %v438, %v434
    %v475 = vpack.c.b16 %v439, %v435
    %v476 = vpack.c.b16 %v440, %v436
    %v477 = vpack.c.b16 %v441, %v437
    %v478 = vpack.c.b16 %v446, %v442
    %v479 = vpack.c.b16 %v447, %v443
    %v480 = vpack.c.b16 %v448, %v444
    %v481 = vpack.c.b16 %v449, %v445
    %514 = vmatprep.subr.bf16.mxu0 %v451
    %515 = vmatpush1.bf16.msra.mxu0 %v450
    %516 = vmatprep.subr.bf16.mxu0 %v455
    %517 = vmatpush1.bf16.msra.mxu0 %v454
    %518 = vmatprep.subr.bf16.mxu0 %v459
    %519 = vmatpush1.bf16.msra.mxu0 %v458
    %520 = vmatprep.subr.bf16.mxu0 %v463
    %521 = vmatpush1.bf16.msra.mxu0 %v462
    %522 = vmatprep.subr.bf16.mxu0 %v467
    %523 = vmatpush1.bf16.msra.mxu0 %v466
    %524 = vmatprep.subr.bf16.mxu0 %v471
    %525 = vmatpush1.bf16.msra.mxu0 %v470
    %526 = vmatprep.subr.bf16.mxu0 %v475
    %527 = vmatpush1.bf16.msra.mxu0 %v474
    %528 = vmatprep.subr.bf16.mxu0 %v479
    %529 = vmatpush1.bf16.msra.mxu0 %v478
    %530 = vmatprep.subr.bf16.mxu0 0
    %531 = vmatpush1.bf16.msra.mxu0 0
    %532 = vmatprep.subr.bf16.mxu0 0
    %533 = vmatpush1.bf16.msra.mxu0 0
    %534 = vmatprep.subr.bf16.mxu0 0
    %535 = vmatpush1.bf16.msra.mxu0 0
    %536 = vmatprep.subr.bf16.mxu0 0
    %537 = vmatpush1.bf16.msra.mxu0 0
    %538 = vmatprep.subr.bf16.mxu0 0
    %539 = vmatpush1.bf16.msra.mxu0 0
    %540 = vmatprep.subr.bf16.mxu0 0
    %541 = vmatpush1.bf16.msra.mxu0 0
    %542 = vmatprep.subr.bf16.mxu0 0
    %543 = vmatpush1.bf16.msra.mxu0 0
    %544 = vmatprep.subr.bf16.mxu0 0
    %545 = vmatpush1.bf16.msra.mxu0 0
    %546 = vmatprep.mubr.bf16.mxu0 0
    %547 = vmatmul.mubr.bf16.gmra.mrb[0].mxu0 0
    %v548 = vpop.f32.mrb[0].mxu0
    %v549 = vadd.f32 0.0, %v548
    %v550 = vpop.f32.mrb[0].mxu0
    %v551 = vadd.f32 0.0, %v550
    %v552 = vpop.f32.mrb[0].mxu0
    %v553 = vpop.f32.mrb[0].mxu0
    %554 = vdwg.mxu0
    %555 = vmatprep.subr.bf16.mxu0 %v453
    %556 = vmatpush1.bf16.msra.mxu0 %v452
    %557 = vmatprep.subr.bf16.mxu0 %v457
    %558 = vmatpush1.bf16.msra.mxu0 %v456
    %559 = vmatprep.subr.bf16.mxu0 %v461
    %560 = vmatpush1.bf16.msra.mxu0 %v460
    %561 = vmatprep.subr.bf16.mxu0 %v465
    %562 = vmatpush1.bf16.msra.mxu0 %v464
    %563 = vmatprep.subr.bf16.mxu0 %v469
    %564 = vmatpush1.bf16.msra.mxu0 %v468
    %565 = vmatprep.subr.bf16.mxu0 %v473
    %566 = vmatpush1.bf16.msra.mxu0 %v472
    %567 = vmatprep.subr.bf16.mxu0 %v477
    %568 = vmatpush1.bf16.msra.mxu0 %v476
    %569 = vmatprep.subr.bf16.mxu0 %v481
    %570 = vmatpush1.bf16.msra.mxu0 %v480
    %571 = vmatprep.subr.bf16.mxu0 0
    %572 = vmatpush1.bf16.msra.mxu0 0
    %573 = vmatprep.subr.bf16.mxu0 0
    %574 = vmatpush1.bf16.msra.mxu0 0
    %575 = vmatprep.subr.bf16.mxu0 0
    %576 = vmatpush1.bf16.msra.mxu0 0
    %577 = vmatprep.subr.bf16.mxu0 0
    %578 = vmatpush1.bf16.msra.mxu0 0
    %579 = vmatprep.subr.bf16.mxu0 0
    %580 = vmatpush1.bf16.msra.mxu0 0
    %581 = vmatprep.subr.bf16.mxu0 0
    %582 = vmatpush1.bf16.msra.mxu0 0
    %583 = vmatprep.subr.bf16.mxu0 0
    %584 = vmatpush1.bf16.msra.mxu0 0
    %585 = vmatprep.subr.bf16.mxu0 0
    %586 = vmatpush1.bf16.msra.mxu0 0
    %587 = vmatprep.mubr.bf16.mxu0 0
    %588 = vmatmul.mubr.bf16.gmra.mrb[0].mxu0 0
    %v589 = vpop.f32.mrb[0].mxu0
    %v590 = vadd.f32 0.0, %v589
    %v591 = vpop.f32.mrb[0].mxu0
    %v592 = vadd.f32 0.0, %v591
    %v593 = vpop.f32.mrb[0].mxu0
    %v594 = vpop.f32.mrb[0].mxu0
    %595 = vdwg.mxu0
    %v596 = vadd.f32 %v318, %v549
    %v597 = vadd.f32 %v319, %v551
    %v598 = vadd.f32 %v320, %v590
    %v599 = vadd.f32 %v321, %v592
    %v600 = vxor.u32 %v596, 2147483648
    %v601 = vmul.f32 %v600, 1.442695
    %v602 = vpow.pop %v601
    %v603 = vadd.f32 %v602, 1.0
    %v604 = vrcp.pop %v603
    %v605 = vmul.f32 1.0, %v604
    %v606 = vxor.u32 %v597, 2147483648
    %v607 = vmul.f32 %v606, 1.442695
    %v608 = vpow.pop %v607
    %v609 = vadd.f32 %v608, 1.0
    %v610 = vrcp.pop %v609
    %v611 = vmul.f32 1.0, %v610
    %v612 = vtanh.pop %v598
    %v613 = vxor.u32 %v599, 2147483648
    %v614 = vmul.f32 %v613, 1.442695
    %v615 = vpow.pop %v614
    %v616 = vadd.f32 %v615, 1.0
    %v617 = vrcp.pop %v616
    %v618 = vmul.f32 1.0, %v617
    %v619 = vmul.f32 %v611, 0.0
    %v620 = vmul.f32 %v605, %v612
    %v621 = vadd.f32 %v619, %v620
    %v622 = vtanh.pop %v621
    %v623 = vmul.f32 %v618, %v622
    %v624 = vlaneseq
    %v625 = vand.u32 %v624, 127
    %vm626 = vcmp.lt.s32.totalorder %v625, 64
    %v627 = vsel %vm626, %v623, 0.0
    %v628 = vsel %vm626, %v621, 0.0
    %s629 = smul.u32 1, 4
    %s630 = smul.addr %s629, 8
    %s631 = scalar_lea.vmem [#allocation2], %s630
    %v632 = vld [vmem:[%s631] sm:$0xff]
    %v633 = vld [vmem:[%s631 + $0x8] sm:$0xff]
    %v634 = vld [vmem:[%s631 + $0x10] sm:$0xff]
    %v635 = vld [vmem:[%s631 + $0x18] sm:$0xff]
    %v636 = vpack.c.bf16 %v627, %v627
    %637 = vmatprep.subr.bf16.mxu0 %v451
    %638 = vmatpush1.bf16.msra.mxu0 %v450
    %639 = vmatprep.subr.bf16.mxu0 %v455
    %640 = vmatpush1.bf16.msra.mxu0 %v454
    %641 = vmatprep.subr.bf16.mxu0 %v459
    %642 = vmatpush1.bf16.msra.mxu0 %v458
    %643 = vmatprep.subr.bf16.mxu0 %v463
    %644 = vmatpush1.bf16.msra.mxu0 %v462
    %645 = vmatprep.subr.bf16.mxu0 %v467
    %646 = vmatpush1.bf16.msra.mxu0 %v466
    %647 = vmatprep.subr.bf16.mxu0 %v471
    %648 = vmatpush1.bf16.msra.mxu0 %v470
    %649 = vmatprep.subr.bf16.mxu0 %v475
    %650 = vmatpush1.bf16.msra.mxu0 %v474
    %651 = vmatprep.subr.bf16.mxu0 %v479
    %652 = vmatpush1.bf16.msra.mxu0 %v478
    %653 = vmatprep.subr.bf16.mxu0 0
    %654 = vmatpush1.bf16.msra.mxu0 0
    %655 = vmatprep.subr.bf16.mxu0 0
    %656 = vmatpush1.bf16.msra.mxu0 0
    %657 = vmatprep.subr.bf16.mxu0 0
    %658 = vmatpush1.bf16.msra.mxu0 0
    %659 = vmatprep.subr.bf16.mxu0 0
    %660 = vmatpush1.bf16.msra.mxu0 0
    %661 = vmatprep.subr.bf16.mxu0 0
    %662 = vmatpush1.bf16.msra.mxu0 0
    %663 = vmatprep.subr.bf16.mxu0 0
    %664 = vmatpush1.bf16.msra.mxu0 0
    %665 = vmatprep.subr.bf16.mxu0 0
    %666 = vmatpush1.bf16.msra.mxu0 0
    %667 = vmatprep.subr.bf16.mxu0 0
    %668 = vmatpush1.bf16.msra.mxu0 0
    %669 = vmatprep.mubr.bf16.mxu0 0
    %670 = vmatmul.mubr.bf16.gmra.mrb[0].mxu0 %v636
    %v671 = vpop.f32.mrb[0].mxu0
    %v672 = vadd.f32 0.0, %v671
    %v673 = vpop.f32.mrb[0].mxu0
    %v674 = vadd.f32 0.0, %v673
    %v675 = vpop.f32.mrb[0].mxu0
    %v676 = vpop.f32.mrb[0].mxu0
    %677 = vdwg.mxu0
    %678 = vmatprep.subr.bf16.mxu0 %v453
    %679 = vmatpush1.bf16.msra.mxu0 %v452
    %680 = vmatprep.subr.bf16.mxu0 %v457
    %681 = vmatpush1.bf16.msra.mxu0 %v456
    %682 = vmatprep.subr.bf16.mxu0 %v461
    %683 = vmatpush1.bf16.msra.mxu0 %v460
    %684 = vmatprep.subr.bf16.mxu0 %v465
    %685 = vmatpush1.bf16.msra.mxu0 %v464
    %686 = vmatprep.subr.bf16.mxu0 %v469
    %687 = vmatpush1.bf16.msra.mxu0 %v468
    %688 = vmatprep.subr.bf16.mxu0 %v473
    %689 = vmatpush1.bf16.msra.mxu0 %v472
    %690 = vmatprep.subr.bf16.mxu0 %v477
    %691 = vmatpush1.bf16.msra.mxu0 %v476
    %692 = vmatprep.subr.bf16.mxu0 %v481
    %693 = vmatpush1.bf16.msra.mxu0 %v480
    %694 = vmatprep.subr.bf16.mxu0 0
    %695 = vmatpush1.bf16.msra.mxu0 0
    %696 = vmatprep.subr.bf16.mxu0 0
    %697 = vmatpush1.bf16.msra.mxu0 0
    %698 = vmatprep.subr.bf16.mxu0 0
    %699 = vmatpush1.bf16.msra.mxu0 0
    %700 = vmatprep.subr.bf16.mxu0 0
    %701 = vmatpush1.bf16.msra.mxu0 0
    %702 = vmatprep.subr.bf16.mxu0 0
    %703 = vmatpush1.bf16.msra.mxu0 0
    %704 = vmatprep.subr.bf16.mxu0 0
    %705 = vmatpush1.bf16.msra.mxu0 0
    %706 = vmatprep.subr.bf16.mxu0 0
    %707 = vmatpush1.bf16.msra.mxu0 0
    %708 = vmatprep.subr.bf16.mxu0 0
    %709 = vmatpush1.bf16.msra.mxu0 0
    %710 = vmatprep.mubr.bf16.mxu0 0
    %711 = vmatmul.mubr.bf16.gmra.mrb[0].mxu0 %v636
    %v712 = vpop.f32.mrb[0].mxu0
    %v713 = vadd.f32 0.0, %v712
    %v714 = vpop.f32.mrb[0].mxu0
    %v715 = vadd.f32 0.0, %v714
    %v716 = vpop.f32.mrb[0].mxu0
    %v717 = vpop.f32.mrb[0].mxu0
    %718 = vdwg.mxu0
    %v719 = vadd.f32 %v632, %v672
    %v720 = vadd.f32 %v633, %v674
    %v721 = vadd.f32 %v634, %v713
    %v722 = vadd.f32 %v635, %v715
    %v723 = vxor.u32 %v719, 2147483648
    %v724 = vmul.f32 %v723, 1.442695
    %v725 = vpow.pop %v724
    %v726 = vadd.f32 %v725, 1.0
    %v727 = vrcp.pop %v726
    %v728 = vmul.f32 1.0, %v727
    %v729 = vxor.u32 %v720, 2147483648
    %v730 = vmul.f32 %v729, 1.442695
    %v731 = vpow.pop %v730
    %v732 = vadd.f32 %v731, 1.0
    %v733 = vrcp.pop %v732
    %v734 = vmul.f32 1.0, %v733
    %v735 = vtanh.pop %v721
    %v736 = vxor.u32 %v722, 2147483648
    %v737 = vmul.f32 %v736, 1.442695
    %v738 = vpow.pop %v737
    %v739 = vadd.f32 %v738, 1.0
    %v740 = vrcp.pop %v739
    %v741 = vmul.f32 1.0, %v740
    %v742 = vmul.f32 %v734, %v628
    %v743 = vmul.f32 %v728, %v735
    %v744 = vadd.f32 %v742, %v743
    %v745 = vtanh.pop %v744
    %v746 = vmul.f32 %v741, %v745
    %s747 = smul.u32 2, 4
    %s748 = smul.addr %s747, 8
    %s749 = scalar_lea.vmem [#allocation2], %s748
    %v750 = vld [vmem:[%s749] sm:$0xff]
    %v751 = vld [vmem:[%s749 + $0x8] sm:$0xff]
    %v752 = vld [vmem:[%s749 + $0x10] sm:$0xff]
    %v753 = vld [vmem:[%s749 + $0x18] sm:$0xff]
    %v754 = vpack.c.bf16 %v746, %v746
    %755 = vmatprep.subr.bf16.mxu0 %v451
    %756 = vmatpush1.bf16.msra.mxu0 %v450
    %757 = vmatprep.subr.bf16.mxu0 %v455
    %758 = vmatpush1.bf16.msra.mxu0 %v454
    %759 = vmatprep.subr.bf16.mxu0 %v459
    %760 = vmatpush1.bf16.msra.mxu0 %v458
    %761 = vmatprep.subr.bf16.mxu0 %v463
    %762 = vmatpush1.bf16.msra.mxu0 %v462
    %763 = vmatprep.subr.bf16.mxu0 %v467
    %764 = vmatpush1.bf16.msra.mxu0 %v466
    %765 = vmatprep.subr.bf16.mxu0 %v471
    %766 = vmatpush1.bf16.msra.mxu0 %v470
    %767 = vmatprep.subr.bf16.mxu0 %v475
    %768 = vmatpush1.bf16.msra.mxu0 %v474
    %769 = vmatprep.subr.bf16.mxu0 %v479
    %770 = vmatpush1.bf16.msra.mxu0 %v478
    %771 = vmatprep.subr.bf16.mxu0 0
    %772 = vmatpush1.bf16.msra.mxu0 0
    %773 = vmatprep.subr.bf16.mxu0 0
    %774 = vmatpush1.bf16.msra.mxu0 0
    %775 = vmatprep.subr.bf16.mxu0 0
    %776 = vmatpush1.bf16.msra.mxu0 0
    %777 = vmatprep.subr.bf16.mxu0 0
    %778 = vmatpush1.bf16.msra.mxu0 0
    %779 = vmatprep.subr.bf16.mxu0 0
    %780 = vmatpush1.bf16.msra.mxu0 0
    %781 = vmatprep.subr.bf16.mxu0 0
    %782 = vmatpush1.bf16.msra.mxu0 0
    %783 = vmatprep.subr.bf16.mxu0 0
    %784 = vmatpush1.bf16.msra.mxu0 0
    %785 = vmatprep.subr.bf16.mxu0 0
    %786 = vmatpush1.bf16.msra.mxu0 0
    %787 = vmatprep.mubr.bf16.mxu0 0
    %788 = vmatmul.mubr.bf16.gmra.mrb[0].mxu0 %v754
    %v789 = vpop.f32.mrb[0].mxu0
    %v790 = vadd.f32 0.0, %v789
    %v791 = vpop.f32.mrb[0].mxu0
    %v792 = vadd.f32 0.0, %v791
    %v793 = vpop.f32.mrb[0].mxu0
    %v794 = vpop.f32.mrb[0].mxu0
    %795 = vdwg.mxu0
    %796 = vmatprep.subr.bf16.mxu0 %v453
    %797 = vmatpush1.bf16.msra.mxu0 %v452
    %798 = vmatprep.subr.bf16.mxu0 %v457
    %799 = vmatpush1.bf16.msra.mxu0 %v456
    %800 = vmatprep.subr.bf16.mxu0 %v461
    %801 = vmatpush1.bf16.msra.mxu0 %v460
    %802 = vmatprep.subr.bf16.mxu0 %v465
    %803 = vmatpush1.bf16.msra.mxu0 %v464
    %804 = vmatprep.subr.bf16.mxu0 %v469
    %805 = vmatpush1.bf16.msra.mxu0 %v468
    %806 = vmatprep.subr.bf16.mxu0 %v473
    %807 = vmatpush1.bf16.msra.mxu0 %v472
    %808 = vmatprep.subr.bf16.mxu0 %v477
    %809 = vmatpush1.bf16.msra.mxu0 %v476
    %810 = vmatprep.subr.bf16.mxu0 %v481
    %811 = vmatpush1.bf16.msra.mxu0 %v480
    %812 = vmatprep.subr.bf16.mxu0 0
    %813 = vmatpush1.bf16.msra.mxu0 0
    %814 = vmatprep.subr.bf16.mxu0 0
    %815 = vmatpush1.bf16.msra.mxu0 0
    %816 = vmatprep.subr.bf16.mxu0 0
    %817 = vmatpush1.bf16.msra.mxu0 0
    %818 = vmatprep.subr.bf16.mxu0 0
    %819 = vmatpush1.bf16.msra.mxu0 0
    %820 = vmatprep.subr.bf16.mxu0 0
    %821 = vmatpush1.bf16.msra.mxu0 0
    %822 = vmatprep.subr.bf16.mxu0 0
    %823 = vmatpush1.bf16.msra.mxu0 0
    %824 = vmatprep.subr.bf16.mxu0 0
    %825 = vmatpush1.bf16.msra.mxu0 0
    %826 = vmatprep.subr.bf16.mxu0 0
    %827 = vmatpush1.bf16.msra.mxu0 0
    %828 = vmatprep.mubr.bf16.mxu0 0
    %829 = vmatmul.mubr.bf16.gmra.mrb[0].mxu0 %v754
    %v830 = vpop.f32.mrb[0].mxu0
    %v831 = vadd.f32 0.0, %v830
    %v832 = vpop.f32.mrb[0].mxu0
    %v833 = vadd.f32 0.0, %v832
    %v834 = vpop.f32.mrb[0].mxu0
    %v835 = vpop.f32.mrb[0].mxu0
    %836 = vdwg.mxu0
    %v837 = vadd.f32 %v750, %v790
    %v838 = vadd.f32 %v751, %v792
    %v839 = vadd.f32 %v752, %v831
    %v840 = vadd.f32 %v753, %v833
    %v841 = vxor.u32 %v837, 2147483648
    %v842 = vmul.f32 %v841, 1.442695
    %v843 = vpow.pop %v842
    %v844 = vadd.f32 %v843, 1.0
    %v845 = vrcp.pop %v844
    %v846 = vmul.f32 1.0, %v845
    %v847 = vxor.u32 %v838, 2147483648
    %v848 = vmul.f32 %v847, 1.442695
    %v849 = vpow.pop %v848
    %v850 = vadd.f32 %v849, 1.0
    %v851 = vrcp.pop %v850
    %v852 = vmul.f32 1.0, %v851
    %v853 = vtanh.pop %v839
    %v854 = vxor.u32 %v840, 2147483648
    %v855 = vmul.f32 %v854, 1.442695
    %v856 = vpow.pop %v855
    %v857 = vadd.f32 %v856, 1.0
    %v858 = vrcp.pop %v857
    %v859 = vmul.f32 1.0, %v858
    %v860 = vmul.f32 %v852, %v744
    %v861 = vmul.f32 %v846, %v853
    %v862 = vadd.f32 %v860, %v861
    %v863 = vtanh.pop %v862
    %v864 = vmul.f32 %v859, %v863
    %s865 = smul.u32 3, 4
    %s866 = smul.addr %s865, 8
    %s867 = scalar_lea.vmem [#allocation2], %s866
    %v868 = vld [vmem:[%s867] sm:$0xff]
    %v869 = vld [vmem:[%s867 + $0x8] sm:$0xff]
    %v870 = vld [vmem:[%s867 + $0x10] sm:$0xff]
    %v871 = vld [vmem:[%s867 + $0x18] sm:$0xff]
    %v872 = vpack.c.bf16 %v864, %v864
    %873 = vmatprep.subr.bf16.mxu0 %v451
    %874 = vmatpush1.bf16.msra.mxu0 %v450
    %875 = vmatprep.subr.bf16.mxu0 %v455
    %876 = vmatpush1.bf16.msra.mxu0 %v454
    %877 = vmatprep.subr.bf16.mxu0 %v459
    %878 = vmatpush1.bf16.msra.mxu0 %v458
    %879 = vmatprep.subr.bf16.mxu0 %v463
    %880 = vmatpush1.bf16.msra.mxu0 %v462
    %881 = vmatprep.subr.bf16.mxu0 %v467
    %882 = vmatpush1.bf16.msra.mxu0 %v466
    %883 = vmatprep.subr.bf16.mxu0 %v471
    %884 = vmatpush1.bf16.msra.mxu0 %v470
    %885 = vmatprep.subr.bf16.mxu0 %v475
    %886 = vmatpush1.bf16.msra.mxu0 %v474
    %887 = vmatprep.subr.bf16.mxu0 %v479
    %888 = vmatpush1.bf16.msra.mxu0 %v478
    %889 = vmatprep.subr.bf16.mxu0 0
    %890 = vmatpush1.bf16.msra.mxu0 0
    %891 = vmatprep.subr.bf16.mxu0 0
    %892 = vmatpush1.bf16.msra.mxu0 0
    %893 = vmatprep.subr.bf16.mxu0 0
    %894 = vmatpush1.bf16.msra.mxu0 0
    %895 = vmatprep.subr.bf16.mxu0 0
    %896 = vmatpush1.bf16.msra.mxu0 0
    %897 = vmatprep.subr.bf16.mxu0 0
    %898 = vmatpush1.bf16.msra.mxu0 0
    %899 = vmatprep.subr.bf16.mxu0 0
    %900 = vmatpush1.bf16.msra.mxu0 0
    %901 = vmatprep.subr.bf16.mxu0 0
    %902 = vmatpush1.bf16.msra.mxu0 0
    %903 = vmatprep.subr.bf16.mxu0 0
    %904 = vmatpush1.bf16.msra.mxu0 0
    %905 = vmatprep.mubr.bf16.mxu0 0
    %906 = vmatmul.mubr.bf16.gmra.mrb[0].mxu0 %v872
    %v907 = vpop.f32.mrb[0].mxu0
    %v908 = vadd.f32 0.0, %v907
    %v909 = vpop.f32.mrb[0].mxu0
    %v910 = vadd.f32 0.0, %v909
    %v911 = vpop.f32.mrb[0].mxu0
    %v912 = vpop.f32.mrb[0].mxu0
    %913 = vdwg.mxu0
    %914 = vmatprep.subr.bf16.mxu0 %v453
    %915 = vmatpush1.bf16.msra.mxu0 %v452
    %916 = vmatprep.subr.bf16.mxu0 %v457
    %917 = vmatpush1.bf16.msra.mxu0 %v456
    %918 = vmatprep.subr.bf16.mxu0 %v461
    %919 = vmatpush1.bf16.msra.mxu0 %v460
    %920 = vmatprep.subr.bf16.mxu0 %v465
    %921 = vmatpush1.bf16.msra.mxu0 %v464
    %922 = vmatprep.subr.bf16.mxu0 %v469
    %923 = vmatpush1.bf16.msra.mxu0 %v468
    %924 = vmatprep.subr.bf16.mxu0 %v473
    %925 = vmatpush1.bf16.msra.mxu0 %v472
    %926 = vmatprep.subr.bf16.mxu0 %v477
    %927 = vmatpush1.bf16.msra.mxu0 %v476
    %928 = vmatprep.subr.bf16.mxu0 %v481
    %929 = vmatpush1.bf16.msra.mxu0 %v480
    %930 = vmatprep.subr.bf16.mxu0 0
    %931 = vmatpush1.bf16.msra.mxu0 0
    %932 = vmatprep.subr.bf16.mxu0 0
    %933 = vmatpush1.bf16.msra.mxu0 0
    %934 = vmatprep.subr.bf16.mxu0 0
    %935 = vmatpush1.bf16.msra.mxu0 0
    %936 = vmatprep.subr.bf16.mxu0 0
    %937 = vmatpush1.bf16.msra.mxu0 0
    %938 = vmatprep.subr.bf16.mxu0 0
    %939 = vmatpush1.bf16.msra.mxu0 0
    %940 = vmatprep.subr.bf16.mxu0 0
    %941 = vmatpush1.bf16.msra.mxu0 0
    %942 = vmatprep.subr.bf16.mxu0 0
    %943 = vmatpush1.bf16.msra.mxu0 0
    %944 = vmatprep.subr.bf16.mxu0 0
    %945 = vmatpush1.bf16.msra.mxu0 0
    %946 = vmatprep.mubr.bf16.mxu0 0
    %947 = vmatmul.mubr.bf16.gmra.mrb[0].mxu0 %v872
    %v948 = vpop.f32.mrb[0].mxu0
    %v949 = vadd.f32 0.0, %v948
    %v950 = vpop.f32.mrb[0].mxu0
    %v951 = vadd.f32 0.0, %v950
    %v952 = vpop.f32.mrb[0].mxu0
    %v953 = vpop.f32.mrb[0].mxu0
    %954 = vdwg.mxu0
    %v955 = vadd.f32 %v868, %v908
    %v956 = vadd.f32 %v869, %v910
    %v957 = vadd.f32 %v870, %v949
    %v958 = vadd.f32 %v871, %v951
    %v959 = vxor.u32 %v955, 2147483648
    %v960 = vmul.f32 %v959, 1.442695
    %v961 = vpow.pop %v960
    %v962 = vadd.f32 %v961, 1.0
    %v963 = vrcp.pop %v962
    %v964 = vmul.f32 1.0, %v963
    %v965 = vxor.u32 %v956, 2147483648
    %v966 = vmul.f32 %v965, 1.442695
    %v967 = vpow.pop %v966
    %v968 = vadd.f32 %v967, 1.0
    %v969 = vrcp.pop %v968
    %v970 = vmul.f32 1.0, %v969
    %v971 = vtanh.pop %v957
    %v972 = vxor.u32 %v958, 2147483648
    %v973 = vmul.f32 %v972, 1.442695
    %v974 = vpow.pop %v973
    %v975 = vadd.f32 %v974, 1.0
    %v976 = vrcp.pop %v975
    %v977 = vmul.f32 1.0, %v976
    %v978 = vmul.f32 %v970, %v862
    %v979 = vmul.f32 %v964, %v971
    %v980 = vadd.f32 %v978, %v979
    %v981 = vtanh.pop %v980
    %v982 = vmul.f32 %v977, %v981
    %s983 = smul.u32 4, 4
    %s984 = smul.addr %s983, 8
    %s985 = scalar_lea.vmem [#allocation2], %s984
    %v986 = vld [vmem:[%s985] sm:$0xff]
    %v987 = vld [vmem:[%s985 + $0x8] sm:$0xff]
    %v988 = vld [vmem:[%s985 + $0x10] sm:$0xff]
    %v989 = vld [vmem:[%s985 + $0x18] sm:$0xff]
    %v990 = vpack.c.bf16 %v982, %v982
    %991 = vmatprep.subr.bf16.mxu0 %v451
    %992 = vmatpush1.bf16.msra.mxu0 %v450
    %993 = vmatprep.subr.bf16.mxu0 %v455
    %994 = vmatpush1.bf16.msra.mxu0 %v454
    %995 = vmatprep.subr.bf16.mxu0 %v459
    %996 = vmatpush1.bf16.msra.mxu0 %v458
    %997 = vmatprep.subr.bf16.mxu0 %v463
    %998 = vmatpush1.bf16.msra.mxu0 %v462
    %999 = vmatprep.subr.bf16.mxu0 %v467
    %1000 = vmatpush1.bf16.msra.mxu0 %v466
    %1001 = vmatprep.subr.bf16.mxu0 %v471
    %1002 = vmatpush1.bf16.msra.mxu0 %v470
    %1003 = vmatprep.subr.bf16.mxu0 %v475
    %1004 = vmatpush1.bf16.msra.mxu0 %v474
    %1005 = vmatprep.subr.bf16.mxu0 %v479
    %1006 = vmatpush1.bf16.msra.mxu0 %v478
    %1007 = vmatprep.subr.bf16.mxu0 0
    %1008 = vmatpush1.bf16.msra.mxu0 0
    %1009 = vmatprep.subr.bf16.mxu0 0
    %1010 = vmatpush1.bf16.msra.mxu0 0
    %1011 = vmatprep.subr.bf16.mxu0 0
    %1012 = vmatpush1.bf16.msra.mxu0 0
    %1013 = vmatprep.subr.bf16.mxu0 0
    %1014 = vmatpush1.bf16.msra.mxu0 0
    %1015 = vmatprep.subr.bf16.mxu0 0
    %1016 = vmatpush1.bf16.msra.mxu0 0
    %1017 = vmatprep.subr.bf16.mxu0 0
    %1018 = vmatpush1.bf16.msra.mxu0 0
    %1019 = vmatprep.subr.bf16.mxu0 0
    %1020 = vmatpush1.bf16.msra.mxu0 0
    %1021 = vmatprep.subr.bf16.mxu0 0
    %1022 = vmatpush1.bf16.msra.mxu0 0
    %1023 = vmatprep.mubr.bf16.mxu0 0
    %1024 = vmatmul.mubr.bf16.gmra.mrb[0].mxu0 %v990
    %v1025 = vpop.f32.mrb[0].mxu0
    %v1026 = vadd.f32 0.0, %v1025
    %v1027 = vpop.f32.mrb[0].mxu0
    %v1028 = vadd.f32 0.0, %v1027
    %v1029 = vpop.f32.mrb[0].mxu0
    %v1030 = vpop.f32.mrb[0].mxu0
    %1031 = vdwg.mxu0
    %1032 = vmatprep.subr.bf16.mxu0 %v453
    %1033 = vmatpush1.bf16.msra.mxu0 %v452
    %1034 = vmatprep.subr.bf16.mxu0 %v457
    %1035 = vmatpush1.bf16.msra.mxu0 %v456
    %1036 = vmatprep.subr.bf16.mxu0 %v461
    %1037 = vmatpush1.bf16.msra.mxu0 %v460
    %1038 = vmatprep.subr.bf16.mxu0 %v465
    %1039 = vmatpush1.bf16.msra.mxu0 %v464
    %1040 = vmatprep.subr.bf16.mxu0 %v469
    %1041 = vmatpush1.bf16.msra.mxu0 %v468
    %1042 = vmatprep.subr.bf16.mxu0 %v473
    %1043 = vmatpush1.bf16.msra.mxu0 %v472
    %1044 = vmatprep.subr.bf16.mxu0 %v477
    %1045 = vmatpush1.bf16.msra.mxu0 %v476
    %1046 = vmatprep.subr.bf16.mxu0 %v481
    %1047 = vmatpush1.bf16.msra.mxu0 %v480
    %1048 = vmatprep.subr.bf16.mxu0 0
    %1049 = vmatpush1.bf16.msra.mxu0 0
    %1050 = vmatprep.subr.bf16.mxu0 0
    %1051 = vmatpush1.bf16.msra.mxu0 0
    %1052 = vmatprep.subr.bf16.mxu0 0
    %1053 = vmatpush1.bf16.msra.mxu0 0
    %1054 = vmatprep.subr.bf16.mxu0 0
    %1055 = vmatpush1.bf16.msra.mxu0 0
    %1056 = vmatprep.subr.bf16.mxu0 0
    %1057 = vmatpush1.bf16.msra.mxu0 0
    %1058 = vmatprep.subr.bf16.mxu0 0
    %1059 = vmatpush1.bf16.msra.mxu0 0
    %1060 = vmatprep.subr.bf16.mxu0 0
    %1061 = vmatpush1.bf16.msra.mxu0 0
    %1062 = vmatprep.subr.bf16.mxu0 0
    %1063 = vmatpush1.bf16.msra.mxu0 0
    %1064 = vmatprep.mubr.bf16.mxu0 0
    %1065 = vmatmul.mubr.bf16.gmra.mrb[0].mxu0 %v990
    %v1066 = vpop.f32.mrb[0].mxu0
    %v1067 = vadd.f32 0.0, %v1066
    %v1068 = vpop.f32.mrb[0].mxu0
    %v1069 = vadd.f32 0.0, %v1068
    %v1070 = vpop.f32.mrb[0].mxu0
    %v1071 = vpop.f32.mrb[0].mxu0
    %1072 = vdwg.mxu0
    %v1073 = vadd.f32 %v986, %v1026
    %v1074 = vadd.f32 %v987, %v1028
    %v1075 = vadd.f32 %v988, %v1067
    %v1076 = vadd.f32 %v989, %v1069
    %v1077 = vxor.u32 %v1073, 2147483648
    %v1078 = vmul.f32 %v1077, 1.442695
    %v1079 = vpow.pop %v1078
    %v1080 = vadd.f32 %v1079, 1.0
    %v1081 = vrcp.pop %v1080
    %v1082 = vmul.f32 1.0, %v1081
    %v1083 = vxor.u32 %v1074, 2147483648
    %v1084 = vmul.f32 %v1083, 1.442695
    %v1085 = vpow.pop %v1084
    %v1086 = vadd.f32 %v1085, 1.0
    %v1087 = vrcp.pop %v1086
    %v1088 = vmul.f32 1.0, %v1087
    %v1089 = vtanh.pop %v1075
    %v1090 = vxor.u32 %v1076, 2147483648
    %v1091 = vmul.f32 %v1090, 1.442695
    %v1092 = vpow.pop %v1091
    %v1093 = vadd.f32 %v1092, 1.0
    %v1094 = vrcp.pop %v1093
    %v1095 = vmul.f32 1.0, %v1094
    %v1096 = vmul.f32 %v1088, %v980
    %v1097 = vmul.f32 %v1082, %v1089
    %v1098 = vadd.f32 %v1096, %v1097
    %v1099 = vtanh.pop %v1098
    %v1100 = vmul.f32 %v1095, %v1099
    %s1101 = smul.u32 5, 4
    %s1102 = smul.addr %s1101, 8
    %s1103 = scalar_lea.vmem [#allocation2], %s1102
    %v1104 = vld [vmem:[%s1103] sm:$0xff]
    %v1105 = vld [vmem:[%s1103 + $0x8] sm:$0xff]
    %v1106 = vld [vmem:[%s1103 + $0x10] sm:$0xff]
    %v1107 = vld [vmem:[%s1103 + $0x18] sm:$0xff]
    %v1108 = vpack.c.bf16 %v1100, %v1100
    %1109 = vmatprep.subr.bf16.mxu0 %v451
    %1110 = vmatpush1.bf16.msra.mxu0 %v450
    %1111 = vmatprep.subr.bf16.mxu0 %v455
    %1112 = vmatpush1.bf16.msra.mxu0 %v454
    %1113 = vmatprep.subr.bf16.mxu0 %v459
    %1114 = vmatpush1.bf16.msra.mxu0 %v458
    %1115 = vmatprep.subr.bf16.mxu0 %v463
    %1116 = vmatpush1.bf16.msra.mxu0 %v462
    %1117 = vmatprep.subr.bf16.mxu0 %v467
    %1118 = vmatpush1.bf16.msra.mxu0 %v466
    %1119 = vmatprep.subr.bf16.mxu0 %v471
    %1120 = vmatpush1.bf16.msra.mxu0 %v470
    %1121 = vmatprep.subr.bf16.mxu0 %v475
    %1122 = vmatpush1.bf16.msra.mxu0 %v474
    %1123 = vmatprep.subr.bf16.mxu0 %v479
    %1124 = vmatpush1.bf16.msra.mxu0 %v478
    %1125 = vmatprep.subr.bf16.mxu0 0
    %1126 = vmatpush1.bf16.msra.mxu0 0
    %1127 = vmatprep.subr.bf16.mxu0 0
    %1128 = vmatpush1.bf16.msra.mxu0 0
    %1129 = vmatprep.subr.bf16.mxu0 0
    %1130 = vmatpush1.bf16.msra.mxu0 0
    %1131 = vmatprep.subr.bf16.mxu0 0
    %1132 = vmatpush1.bf16.msra.mxu0 0
    %1133 = vmatprep.subr.bf16.mxu0 0
    %1134 = vmatpush1.bf16.msra.mxu0 0
    %1135 = vmatprep.subr.bf16.mxu0 0
    %1136 = vmatpush1.bf16.msra.mxu0 0
    %1137 = vmatprep.subr.bf16.mxu0 0
    %1138 = vmatpush1.bf16.msra.mxu0 0
    %1139 = vmatprep.subr.bf16.mxu0 0
    %1140 = vmatpush1.bf16.msra.mxu0 0
    %1141 = vmatprep.mubr.bf16.mxu0 0
    %1142 = vmatmul.mubr.bf16.gmra.mrb[0].mxu0 %v1108
    %v1143 = vpop.f32.mrb[0].mxu0
    %v1144 = vadd.f32 0.0, %v1143
    %v1145 = vpop.f32.mrb[0].mxu0
    %v1146 = vadd.f32 0.0, %v1145
    %v1147 = vpop.f32.mrb[0].mxu0
    %v1148 = vpop.f32.mrb[0].mxu0
    %1149 = vdwg.mxu0
    %1150 = vmatprep.subr.bf16.mxu0 %v453
    %1151 = vmatpush1.bf16.msra.mxu0 %v452
    %1152 = vmatprep.subr.bf16.mxu0 %v457
    %1153 = vmatpush1.bf16.msra.mxu0 %v456
    %1154 = vmatprep.subr.bf16.mxu0 %v461
    %1155 = vmatpush1.bf16.msra.mxu0 %v460
    %1156 = vmatprep.subr.bf16.mxu0 %v465
    %1157 = vmatpush1.bf16.msra.mxu0 %v464
    %1158 = vmatprep.subr.bf16.mxu0 %v469
    %1159 = vmatpush1.bf16.msra.mxu0 %v468
    %1160 = vmatprep.subr.bf16.mxu0 %v473
    %1161 = vmatpush1.bf16.msra.mxu0 %v472
    %1162 = vmatprep.subr.bf16.mxu0 %v477
    %1163 = vmatpush1.bf16.msra.mxu0 %v476
    %1164 = vmatprep.subr.bf16.mxu0 %v481
    %1165 = vmatpush1.bf16.msra.mxu0 %v480
    %1166 = vmatprep.subr.bf16.mxu0 0
    %1167 = vmatpush1.bf16.msra.mxu0 0
    %1168 = vmatprep.subr.bf16.mxu0 0
    %1169 = vmatpush1.bf16.msra.mxu0 0
    %1170 = vmatprep.subr.bf16.mxu0 0
    %1171 = vmatpush1.bf16.msra.mxu0 0
    %1172 = vmatprep.subr.bf16.mxu0 0
    %1173 = vmatpush1.bf16.msra.mxu0 0
    %1174 = vmatprep.subr.bf16.mxu0 0
    %1175 = vmatpush1.bf16.msra.mxu0 0
    %1176 = vmatprep.subr.bf16.mxu0 0
    %1177 = vmatpush1.bf16.msra.mxu0 0
    %1178 = vmatprep.subr.bf16.mxu0 0
    %1179 = vmatpush1.bf16.msra.mxu0 0
    %1180 = vmatprep.subr.bf16.mxu0 0
    %1181 = vmatpush1.bf16.msra.mxu0 0
    %1182 = vmatprep.mubr.bf16.mxu0 0
    %1183 = vmatmul.mubr.bf16.gmra.mrb[0].mxu0 %v1108
    %v1184 = vpop.f32.mrb[0].mxu0
    %v1185 = vadd.f32 0.0, %v1184
    %v1186 = vpop.f32.mrb[0].mxu0
    %v1187 = vadd.f32 0.0, %v1186
    %v1188 = vpop.f32.mrb[0].mxu0
    %v1189 = vpop.f32.mrb[0].mxu0
    %1190 = vdwg.mxu0
    %v1191 = vadd.f32 %v1104, %v1144
    %v1192 = vadd.f32 %v1105, %v1146
    %v1193 = vadd.f32 %v1106, %v1185
    %v1194 = vadd.f32 %v1107, %v1187
    %v1195 = vxor.u32 %v1191, 2147483648
    %v1196 = vmul.f32 %v1195, 1.442695
    %v1197 = vpow.pop %v1196
    %v1198 = vadd.f32 %v1197, 1.0
    %v1199 = vrcp.pop %v1198
    %v1200 = vmul.f32 1.0, %v1199
    %v1201 = vxor.u32 %v1192, 2147483648
    %v1202 = vmul.f32 %v1201, 1.442695
    %v1203 = vpow.pop %v1202
    %v1204 = vadd.f32 %v1203, 1.0
    %v1205 = vrcp.pop %v1204
    %v1206 = vmul.f32 1.0, %v1205
    %v1207 = vtanh.pop %v1193
    %v1208 = vxor.u32 %v1194, 2147483648
    %v1209 = vmul.f32 %v1208, 1.442695
    %v1210 = vpow.pop %v1209
    %v1211 = vadd.f32 %v1210, 1.0
    %v1212 = vrcp.pop %v1211
    %v1213 = vmul.f32 1.0, %v1212
    %v1214 = vmul.f32 %v1206, %v1098
    %v1215 = vmul.f32 %v1200, %v1207
    %v1216 = vadd.f32 %v1214, %v1215
    %v1217 = vtanh.pop %v1216
    %v1218 = vmul.f32 %v1213, %v1217
    %s1219 = smul.u32 6, 4
    %s1220 = smul.addr %s1219, 8
    %s1221 = scalar_lea.vmem [#allocation2], %s1220
    %v1222 = vld [vmem:[%s1221] sm:$0xff]
    %v1223 = vld [vmem:[%s1221 + $0x8] sm:$0xff]
    %v1224 = vld [vmem:[%s1221 + $0x10] sm:$0xff]
    %v1225 = vld [vmem:[%s1221 + $0x18] sm:$0xff]
    %v1226 = vpack.c.bf16 %v1218, %v1218
    %1227 = vmatprep.subr.bf16.mxu0 %v451
    %1228 = vmatpush1.bf16.msra.mxu0 %v450
    %1229 = vmatprep.subr.bf16.mxu0 %v455
    %1230 = vmatpush1.bf16.msra.mxu0 %v454
    %1231 = vmatprep.subr.bf16.mxu0 %v459
    %1232 = vmatpush1.bf16.msra.mxu0 %v458
    %1233 = vmatprep.subr.bf16.mxu0 %v463
    %1234 = vmatpush1.bf16.msra.mxu0 %v462
    %1235 = vmatprep.subr.bf16.mxu0 %v467
    %1236 = vmatpush1.bf16.msra.mxu0 %v466
    %1237 = vmatprep.subr.bf16.mxu0 %v471
    %1238 = vmatpush1.bf16.msra.mxu0 %v470
    %1239 = vmatprep.subr.bf16.mxu0 %v475
    %1240 = vmatpush1.bf16.msra.mxu0 %v474
    %1241 = vmatprep.subr.bf16.mxu0 %v479
    %1242 = vmatpush1.bf16.msra.mxu0 %v478
    %1243 = vmatprep.subr.bf16.mxu0 0
    %1244 = vmatpush1.bf16.msra.mxu0 0
    %1245 = vmatprep.subr.bf16.mxu0 0
    %1246 = vmatpush1.bf16.msra.mxu0 0
    %1247 = vmatprep.subr.bf16.mxu0 0
    %1248 = vmatpush1.bf16.msra.mxu0 0
    %1249 = vmatprep.subr.bf16.mxu0 0
    %1250 = vmatpush1.bf16.msra.mxu0 0
    %1251 = vmatprep.subr.bf16.mxu0 0
    %1252 = vmatpush1.bf16.msra.mxu0 0
    %1253 = vmatprep.subr.bf16.mxu0 0
    %1254 = vmatpush1.bf16.msra.mxu0 0
    %1255 = vmatprep.subr.bf16.mxu0 0
    %1256 = vmatpush1.bf16.msra.mxu0 0
    %1257 = vmatprep.subr.bf16.mxu0 0
    %1258 = vmatpush1.bf16.msra.mxu0 0
    %1259 = vmatprep.mubr.bf16.mxu0 0
    %1260 = vmatmul.mubr.bf16.gmra.mrb[0].mxu0 %v1226
    %v1261 = vpop.f32.mrb[0].mxu0
    %v1262 = vadd.f32 0.0, %v1261
    %v1263 = vpop.f32.mrb[0].mxu0
    %v1264 = vadd.f32 0.0, %v1263
    %v1265 = vpop.f32.mrb[0].mxu0
    %v1266 = vpop.f32.mrb[0].mxu0
    %1267 = vdwg.mxu0
    %1268 = vmatprep.subr.bf16.mxu0 %v453
    %1269 = vmatpush1.bf16.msra.mxu0 %v452
    %1270 = vmatprep.subr.bf16.mxu0 %v457
    %1271 = vmatpush1.bf16.msra.mxu0 %v456
    %1272 = vmatprep.subr.bf16.mxu0 %v461
    %1273 = vmatpush1.bf16.msra.mxu0 %v460
    %1274 = vmatprep.subr.bf16.mxu0 %v465
    %1275 = vmatpush1.bf16.msra.mxu0 %v464
    %1276 = vmatprep.subr.bf16.mxu0 %v469
    %1277 = vmatpush1.bf16.msra.mxu0 %v468
    %1278 = vmatprep.subr.bf16.mxu0 %v473
    %1279 = vmatpush1.bf16.msra.mxu0 %v472
    %1280 = vmatprep.subr.bf16.mxu0 %v477
    %1281 = vmatpush1.bf16.msra.mxu0 %v476
    %1282 = vmatprep.subr.bf16.mxu0 %v481
    %1283 = vmatpush1.bf16.msra.mxu0 %v480
    %1284 = vmatprep.subr.bf16.mxu0 0
    %1285 = vmatpush1.bf16.msra.mxu0 0
    %1286 = vmatprep.subr.bf16.mxu0 0
    %1287 = vmatpush1.bf16.msra.mxu0 0
    %1288 = vmatprep.subr.bf16.mxu0 0
    %1289 = vmatpush1.bf16.msra.mxu0 0
    %1290 = vmatprep.subr.bf16.mxu0 0
    %1291 = vmatpush1.bf16.msra.mxu0 0
    %1292 = vmatprep.subr.bf16.mxu0 0
    %1293 = vmatpush1.bf16.msra.mxu0 0
    %1294 = vmatprep.subr.bf16.mxu0 0
    %1295 = vmatpush1.bf16.msra.mxu0 0
    %1296 = vmatprep.subr.bf16.mxu0 0
    %1297 = vmatpush1.bf16.msra.mxu0 0
    %1298 = vmatprep.subr.bf16.mxu0 0
    %1299 = vmatpush1.bf16.msra.mxu0 0
    %1300 = vmatprep.mubr.bf16.mxu0 0
    %1301 = vmatmul.mubr.bf16.gmra.mrb[0].mxu0 %v1226
    %v1302 = vpop.f32.mrb[0].mxu0
    %v1303 = vadd.f32 0.0, %v1302
    %v1304 = vpop.f32.mrb[0].mxu0
    %v1305 = vadd.f32 0.0, %v1304
    %v1306 = vpop.f32.mrb[0].mxu0
    %v1307 = vpop.f32.mrb[0].mxu0
    %1308 = vdwg.mxu0
    %v1309 = vadd.f32 %v1222, %v1262
    %v1310 = vadd.f32 %v1223, %v1264
    %v1311 = vadd.f32 %v1224, %v1303
    %v1312 = vadd.f32 %v1225, %v1305
    %v1313 = vxor.u32 %v1309, 2147483648
    %v1314 = vmul.f32 %v1313, 1.442695
    %v1315 = vpow.pop %v1314
    %v1316 = vadd.f32 %v1315, 1.0
    %v1317 = vrcp.pop %v1316
    %v1318 = vmul.f32 1.0, %v1317
    %v1319 = vxor.u32 %v1310, 2147483648
    %v1320 = vmul.f32 %v1319, 1.442695
    %v1321 = vpow.pop %v1320
    %v1322 = vadd.f32 %v1321, 1.0
    %v1323 = vrcp.pop %v1322
    %v1324 = vmul.f32 1.0, %v1323
    %v1325 = vtanh.pop %v1311
    %v1326 = vxor.u32 %v1312, 2147483648
    %v1327 = vmul.f32 %v1326, 1.442695
    %v1328 = vpow.pop %v1327
    %v1329 = vadd.f32 %v1328, 1.0
    %v1330 = vrcp.pop %v1329
    %v1331 = vmul.f32 1.0, %v1330
    %v1332 = vmul.f32 %v1324, %v1216
    %v1333 = vmul.f32 %v1318, %v1325
    %v1334 = vadd.f32 %v1332, %v1333
    %v1335 = vtanh.pop %v1334
    %v1336 = vmul.f32 %v1331, %v1335
    %s1337 = smul.u32 7, 4
    %s1338 = smul.addr %s1337, 8
    %s1339 = scalar_lea.vmem [#allocation2], %s1338
    %v1340 = vld [vmem:[%s1339] sm:$0xff]
    %v1341 = vld [vmem:[%s1339 + $0x8] sm:$0xff]
    %v1342 = vld [vmem:[%s1339 + $0x10] sm:$0xff]
    %v1343 = vld [vmem:[%s1339 + $0x18] sm:$0xff]
    %v1344 = vpack.c.bf16 %v1336, %v1336
    %1345 = vmatprep.subr.bf16.mxu0 %v451
    %1346 = vmatpush1.bf16.msra.mxu0 %v450
    %1347 = vmatprep.subr.bf16.mxu0 %v455
    %1348 = vmatpush1.bf16.msra.mxu0 %v454
    %1349 = vmatprep.subr.bf16.mxu0 %v459
    %1350 = vmatpush1.bf16.msra.mxu0 %v458
    %1351 = vmatprep.subr.bf16.mxu0 %v463
    %1352 = vmatpush1.bf16.msra.mxu0 %v462
    %1353 = vmatprep.subr.bf16.mxu0 %v467
    %1354 = vmatpush1.bf16.msra.mxu0 %v466
    %1355 = vmatprep.subr.bf16.mxu0 %v471
    %1356 = vmatpush1.bf16.msra.mxu0 %v470
    %1357 = vmatprep.subr.bf16.mxu0 %v475
    %1358 = vmatpush1.bf16.msra.mxu0 %v474
    %1359 = vmatprep.subr.bf16.mxu0 %v479
    %1360 = vmatpush1.bf16.msra.mxu0 %v478
    %1361 = vmatprep.subr.bf16.mxu0 0
    %1362 = vmatpush1.bf16.msra.mxu0 0
    %1363 = vmatprep.subr.bf16.mxu0 0
    %1364 = vmatpush1.bf16.msra.mxu0 0
    %1365 = vmatprep.subr.bf16.mxu0 0
    %1366 = vmatpush1.bf16.msra.mxu0 0
    %1367 = vmatprep.subr.bf16.mxu0 0
    %1368 = vmatpush1.bf16.msra.mxu0 0
    %1369 = vmatprep.subr.bf16.mxu0 0
    %1370 = vmatpush1.bf16.msra.mxu0 0
    %1371 = vmatprep.subr.bf16.mxu0 0
    %1372 = vmatpush1.bf16.msra.mxu0 0
    %1373 = vmatprep.subr.bf16.mxu0 0
    %1374 = vmatpush1.bf16.msra.mxu0 0
    %1375 = vmatprep.subr.bf16.mxu0 0
    %1376 = vmatpush1.bf16.msra.mxu0 0
    %1377 = vmatprep.mubr.bf16.mxu0 0
    %1378 = vmatmul.mubr.bf16.gmra.mrb[0].mxu0 %v1344
    %v1379 = vpop.f32.mrb[0].mxu0
    %v1380 = vadd.f32 0.0, %v1379
    %v1381 = vpop.f32.mrb[0].mxu0
    %v1382 = vadd.f32 0.0, %v1381
    %v1383 = vpop.f32.mrb[0].mxu0
    %v1384 = vpop.f32.mrb[0].mxu0
    %1385 = vdwg.mxu0
    %1386 = vmatprep.subr.bf16.mxu0 %v453
    %1387 = vmatpush1.bf16.msra.mxu0 %v452
    %1388 = vmatprep.subr.bf16.mxu0 %v457
    %1389 = vmatpush1.bf16.msra.mxu0 %v456
    %1390 = vmatprep.subr.bf16.mxu0 %v461
    %1391 = vmatpush1.bf16.msra.mxu0 %v460
    %1392 = vmatprep.subr.bf16.mxu0 %v465
    %1393 = vmatpush1.bf16.msra.mxu0 %v464
    %1394 = vmatprep.subr.bf16.mxu0 %v469
    %1395 = vmatpush1.bf16.msra.mxu0 %v468
    %1396 = vmatprep.subr.bf16.mxu0 %v473
    %1397 = vmatpush1.bf16.msra.mxu0 %v472
    %1398 = vmatprep.subr.bf16.mxu0 %v477
    %1399 = vmatpush1.bf16.msra.mxu0 %v476
    %1400 = vmatprep.subr.bf16.mxu0 %v481
    %1401 = vmatpush1.bf16.msra.mxu0 %v480
    %1402 = vmatprep.subr.bf16.mxu0 0
    %1403 = vmatpush1.bf16.msra.mxu0 0
    %1404 = vmatprep.subr.bf16.mxu0 0
    %1405 = vmatpush1.bf16.msra.mxu0 0
    %1406 = vmatprep.subr.bf16.mxu0 0
    %1407 = vmatpush1.bf16.msra.mxu0 0
    %1408 = vmatprep.subr.bf16.mxu0 0
    %1409 = vmatpush1.bf16.msra.mxu0 0
    %1410 = vmatprep.subr.bf16.mxu0 0
    %1411 = vmatpush1.bf16.msra.mxu0 0
    %1412 = vmatprep.subr.bf16.mxu0 0
    %1413 = vmatpush1.bf16.msra.mxu0 0
    %1414 = vmatprep.subr.bf16.mxu0 0
    %1415 = vmatpush1.bf16.msra.mxu0 0
    %1416 = vmatprep.subr.bf16.mxu0 0
    %1417 = vmatpush1.bf16.msra.mxu0 0
    %1418 = vmatprep.mubr.bf16.mxu0 0
    %1419 = vmatmul.mubr.bf16.gmra.mrb[0].mxu0 %v1344
    %v1420 = vpop.f32.mrb[0].mxu0
    %v1421 = vadd.f32 0.0, %v1420
    %v1422 = vpop.f32.mrb[0].mxu0
    %v1423 = vadd.f32 0.0, %v1422
    %v1424 = vpop.f32.mrb[0].mxu0
    %v1425 = vpop.f32.mrb[0].mxu0
    %1426 = vdwg.mxu0
    %v1427 = vadd.f32 %v1340, %v1380
    %v1428 = vadd.f32 %v1341, %v1382
    %v1429 = vadd.f32 %v1342, %v1421
    %v1430 = vadd.f32 %v1343, %v1423
    %v1431 = vxor.u32 %v1427, 2147483648
    %v1432 = vmul.f32 %v1431, 1.442695
    %v1433 = vpow.pop %v1432
    %v1434 = vadd.f32 %v1433, 1.0
    %v1435 = vrcp.pop %v1434
    %v1436 = vmul.f32 1.0, %v1435
    %v1437 = vxor.u32 %v1428, 2147483648
    %v1438 = vmul.f32 %v1437, 1.442695
    %v1439 = vpow.pop %v1438
    %v1440 = vadd.f32 %v1439, 1.0
    %v1441 = vrcp.pop %v1440
    %v1442 = vmul.f32 1.0, %v1441
    %v1443 = vtanh.pop %v1429
    %v1444 = vxor.u32 %v1430, 2147483648
    %v1445 = vmul.f32 %v1444, 1.442695
    %v1446 = vpow.pop %v1445
    %v1447 = vadd.f32 %v1446, 1.0
    %v1448 = vrcp.pop %v1447
    %v1449 = vmul.f32 1.0, %v1448
    %v1450 = vmul.f32 %v1442, %v1334
    %v1451 = vmul.f32 %v1436, %v1443
    %v1452 = vadd.f32 %v1450, %v1451
    %v1453 = vtanh.pop %v1452
    %v1454 = vmul.f32 %v1449, %v1453
    %v1455 = vld [vmem:[#allocation2 + $0xe0] sm:$0xff]
    %v1456 = vld [vmem:[#allocation2 + $0xe8] sm:$0xff]
    %v1457 = vld [vmem:[#allocation2 + $0xf0] sm:$0xff]
    %v1458 = vld [vmem:[#allocation2 + $0xf8] sm:$0xff]
    %v1459 = vpack.c.bf16 %v1454, %v1454
    %1460 = vmatprep.subr.bf16.mxu0 %v451
    %1461 = vmatpush1.bf16.msra.mxu0 %v450
    %1462 = vmatprep.subr.bf16.mxu0 %v455
    %1463 = vmatpush1.bf16.msra.mxu0 %v454
    %1464 = vmatprep.subr.bf16.mxu0 %v459
    %1465 = vmatpush1.bf16.msra.mxu0 %v458
    %1466 = vmatprep.subr.bf16.mxu0 %v463
    %1467 = vmatpush1.bf16.msra.mxu0 %v462
    %1468 = vmatprep.subr.bf16.mxu0 %v467
    %1469 = vmatpush1.bf16.msra.mxu0 %v466
    %1470 = vmatprep.subr.bf16.mxu0 %v471
    %1471 = vmatpush1.bf16.msra.mxu0 %v470
    %1472 = vmatprep.subr.bf16.mxu0 %v475
    %1473 = vmatpush1.bf16.msra.mxu0 %v474
    %1474 = vmatprep.subr.bf16.mxu0 %v479
    %1475 = vmatpush1.bf16.msra.mxu0 %v478
    %1476 = vmatprep.subr.bf16.mxu0 0
    %1477 = vmatpush1.bf16.msra.mxu0 0
    %1478 = vmatprep.subr.bf16.mxu0 0
    %1479 = vmatpush1.bf16.msra.mxu0 0
    %1480 = vmatprep.subr.bf16.mxu0 0
    %1481 = vmatpush1.bf16.msra.mxu0 0
    %1482 = vmatprep.subr.bf16.mxu0 0
    %1483 = vmatpush1.bf16.msra.mxu0 0
    %1484 = vmatprep.subr.bf16.mxu0 0
    %1485 = vmatpush1.bf16.msra.mxu0 0
    %1486 = vmatprep.subr.bf16.mxu0 0
    %1487 = vmatpush1.bf16.msra.mxu0 0
    %1488 = vmatprep.subr.bf16.mxu0 0
    %1489 = vmatpush1.bf16.msra.mxu0 0
    %1490 = vmatprep.subr.bf16.mxu0 0
    %1491 = vmatpush1.bf16.msra.mxu0 0
    %1492 = vmatprep.mubr.bf16.mxu0 0
    %1493 = vmatmul.mubr.bf16.gmra.mrb[0].mxu0 %v1459
    %v1494 = vpop.f32.mrb[0].mxu0
    %v1495 = vadd.f32 0.0, %v1494
    %v1496 = vpop.f32.mrb[0].mxu0
    %v1497 = vadd.f32 0.0, %v1496
    %v1498 = vpop.f32.mrb[0].mxu0
    %v1499 = vpop.f32.mrb[0].mxu0
    %1500 = vdwg.mxu0
    %1501 = vmatprep.subr.bf16.mxu0 %v453
    %1502 = vmatpush1.bf16.msra.mxu0 %v452
    %1503 = vmatprep.subr.bf16.mxu0 %v457
    %1504 = vmatpush1.bf16.msra.mxu0 %v456
    %1505 = vmatprep.subr.bf16.mxu0 %v461
    %1506 = vmatpush1.bf16.msra.mxu0 %v460
    %1507 = vmatprep.subr.bf16.mxu0 %v465
    %1508 = vmatpush1.bf16.msra.mxu0 %v464
    %1509 = vmatprep.subr.bf16.mxu0 %v469
    %1510 = vmatpush1.bf16.msra.mxu0 %v468
    %1511 = vmatprep.subr.bf16.mxu0 %v473
    %1512 = vmatpush1.bf16.msra.mxu0 %v472
    %1513 = vmatprep.subr.bf16.mxu0 %v477
    %1514 = vmatpush1.bf16.msra.mxu0 %v476
    %1515 = vmatprep.subr.bf16.mxu0 %v481
    %1516 = vmatpush1.bf16.msra.mxu0 %v480
    %1517 = vmatprep.subr.bf16.mxu0 0
    %1518 = vmatpush1.bf16.msra.mxu0 0
    %1519 = vmatprep.subr.bf16.mxu0 0
    %1520 = vmatpush1.bf16.msra.mxu0 0
    %1521 = vmatprep.subr.bf16.mxu0 0
    %1522 = vmatpush1.bf16.msra.mxu0 0
    %1523 = vmatprep.subr.bf16.mxu0 0
    %1524 = vmatpush1.bf16.msra.mxu0 0
    %1525 = vmatprep.subr.bf16.mxu0 0
    %1526 = vmatpush1.bf16.msra.mxu0 0
    %1527 = vmatprep.subr.bf16.mxu0 0
    %1528 = vmatpush1.bf16.msra.mxu0 0
    %1529 = vmatprep.subr.bf16.mxu0 0
    %1530 = vmatpush1.bf16.msra.mxu0 0
    %1531 = vmatprep.subr.bf16.mxu0 0
    %1532 = vmatpush1.bf16.msra.mxu0 0
    %1533 = vmatprep.mubr.bf16.mxu0 0
    %1534 = vmatmul.mubr.bf16.gmra.mrb[0].mxu0 %v1459
    %v1535 = vpop.f32.mrb[0].mxu0
    %v1536 = vadd.f32 0.0, %v1535
    %v1537 = vpop.f32.mrb[0].mxu0
    %v1538 = vadd.f32 0.0, %v1537
    %v1539 = vpop.f32.mrb[0].mxu0
    %v1540 = vpop.f32.mrb[0].mxu0
    %1541 = vdwg.mxu0
    %v1542 = vadd.f32 %v1455, %v1495
    %v1543 = vadd.f32 %v1456, %v1497
    %v1544 = vadd.f32 %v1457, %v1536
    %v1545 = vadd.f32 %v1458, %v1538
    %v1546 = vxor.u32 %v1542, 2147483648
    %v1547 = vmul.f32 %v1546, 1.442695
    %v1548 = vpow.pop %v1547
    %v1549 = vadd.f32 %v1548, 1.0
    %v1550 = vrcp.pop %v1549
    %v1551 = vmul.f32 1.0, %v1550
    %v1552 = vxor.u32 %v1543, 2147483648
    %v1553 = vmul.f32 %v1552, 1.442695
    %v1554 = vpow.pop %v1553
    %v1555 = vadd.f32 %v1554, 1.0
    %v1556 = vrcp.pop %v1555
    %v1557 = vmul.f32 1.0, %v1556
    %v1558 = vtanh.pop %v1544
    %v1559 = vxor.u32 %v1545, 2147483648
    %v1560 = vmul.f32 %v1559, 1.442695
    %v1561 = vpow.pop %v1560
    %v1562 = vadd.f32 %v1561, 1.0
    %v1563 = vrcp.pop %v1562
    %v1564 = vmul.f32 1.0, %v1563
    %v1565 = vmul.f32 %v1557, %v1452
    %v1566 = vmul.f32 %v1551, %v1558
    %v1567 = vadd.f32 %v1565, %v1566
    %v1568 = vtanh.pop %v1567
    %v1569 = vmul.f32 %v1564, %v1568
    %v1570 = vpack.c.bf16 %v1569, %v1569
    %v1571 = vld [vmem:[#allocation6] sm:$0xf]
    %v1572 = vld [vmem:[#allocation6 + $0x4] sm:$0xf]
    %v1573 = vld [vmem:[#allocation6 + $0x8] sm:$0xf]
    %v1574 = vld [vmem:[#allocation6 + $0xc] sm:$0xf]
    %v1575 = vld [vmem:[#allocation6 + $0x10] sm:$0xf]
    %v1576 = vld [vmem:[#allocation6 + $0x14] sm:$0xf]
    %v1577 = vld [vmem:[#allocation6 + $0x18] sm:$0xf]
    %v1578 = vld [vmem:[#allocation6 + $0x1c] sm:$0xf]
    %v1579 = vld [vmem:[#allocation6 + $0x20] sm:$0xf]
    %v1580 = vld [vmem:[#allocation6 + $0x24] sm:$0xf]
    %v1581 = vld [vmem:[#allocation6 + $0x28] sm:$0xf]
    %v1582 = vld [vmem:[#allocation6 + $0x2c] sm:$0xf]
    %v1583 = vld [vmem:[#allocation6 + $0x30] sm:$0xf]
    %v1584 = vld [vmem:[#allocation6 + $0x34] sm:$0xf]
    %v1585 = vld [vmem:[#allocation6 + $0x38] sm:$0xf]
    %v1586 = vld [vmem:[#allocation6 + $0x3c] sm:$0xf]
    %v1587 = vld [vmem:[%s5] sm:$0x1]
    %v1589 = vlaneseq
    %v1590 = vshrl.u32 %v1589, 7
    %v1591 = vsub.s32 0, %v1590
    %v1592 = vrot.slane %v1587, %v1591
    %v1610 = vunpack.c.l.b16 %v1571
    %v1611 = vunpack.c.l.b16 %v1572
    %v1612 = vunpack.c.l.b16 %v1573
    %v1613 = vunpack.c.l.b16 %v1574
    %v1614 = vunpack.c.l.b16 %v1575
    %v1615 = vunpack.c.l.b16 %v1576
    %v1616 = vunpack.c.l.b16 %v1577
    %v1617 = vunpack.c.l.b16 %v1578
    %v1618 = vunpack.c.l.b16 %v1579
    %v1619 = vunpack.c.l.b16 %v1580
    %v1620 = vunpack.c.l.b16 %v1581
    %v1621 = vunpack.c.l.b16 %v1582
    %v1622 = vunpack.c.l.b16 %v1583
    %v1623 = vunpack.c.l.b16 %v1584
    %v1624 = vunpack.c.l.b16 %v1585
    %v1625 = vunpack.c.l.b16 %v1586
    %v1626 = vpack.c.b16 %v1611, %v1610
    %v1627 = vpack.c.b16 %v1613, %v1612
    %v1628 = vpack.c.b16 %v1615, %v1614
    %v1629 = vpack.c.b16 %v1617, %v1616
    %v1630 = vpack.c.b16 %v1619, %v1618
    %v1631 = vpack.c.b16 %v1621, %v1620
    %v1632 = vpack.c.b16 %v1623, %v1622
    %v1633 = vpack.c.b16 %v1625, %v1624
    %1642 = vmatprep.subr.bf16.mxu0 0
    %1643 = vmatpush1.bf16.msra.mxu0 %v1626
    %1644 = vmatprep.subr.bf16.mxu0 0
    %1645 = vmatpush1.bf16.msra.mxu0 %v1627
    %1646 = vmatprep.subr.bf16.mxu0 0
    %1647 = vmatpush1.bf16.msra.mxu0 %v1628
    %1648 = vmatprep.subr.bf16.mxu0 0
    %1649 = vmatpush1.bf16.msra.mxu0 %v1629
    %1650 = vmatprep.subr.bf16.mxu0 0
    %1651 = vmatpush1.bf16.msra.mxu0 %v1630
    %1652 = vmatprep.subr.bf16.mxu0 0
    %1653 = vmatpush1.bf16.msra.mxu0 %v1631
    %1654 = vmatprep.subr.bf16.mxu0 0
    %1655 = vmatpush1.bf16.msra.mxu0 %v1632
    %1656 = vmatprep.subr.bf16.mxu0 0
    %1657 = vmatpush1.bf16.msra.mxu0 %v1633
    %1658 = vmatprep.subr.bf16.mxu0 0
    %1659 = vmatpush1.bf16.msra.mxu0 0
    %1660 = vmatprep.subr.bf16.mxu0 0
    %1661 = vmatpush1.bf16.msra.mxu0 0
    %1662 = vmatprep.subr.bf16.mxu0 0
    %1663 = vmatpush1.bf16.msra.mxu0 0
    %1664 = vmatprep.subr.bf16.mxu0 0
    %1665 = vmatpush1.bf16.msra.mxu0 0
    %1666 = vmatprep.subr.bf16.mxu0 0
    %1667 = vmatpush1.bf16.msra.mxu0 0
    %1668 = vmatprep.subr.bf16.mxu0 0
    %1669 = vmatpush1.bf16.msra.mxu0 0
    %1670 = vmatprep.subr.bf16.mxu0 0
    %1671 = vmatpush1.bf16.msra.mxu0 0
    %1672 = vmatprep.subr.bf16.mxu0 0
    %1673 = vmatpush1.bf16.msra.mxu0 0
    %1674 = vmatprep.mubr.bf16.mxu0 0
    %1675 = vmatmul.mubr.bf16.gmra.mrb[0].mxu0 %v1570
    %v1676 = vpop.f32.mrb[0].mxu0
    %v1677 = vadd.f32 %v1592, %v1676
    %v1678 = vpop.f32.mrb[0].mxu0
    %v1679 = vpop.f32.mrb[0].mxu0
    %v1680 = vpop.f32.mrb[0].mxu0
    %1681 = vdwg.mxu0
    %1682 = vst [vmem:[#allocation8] sm:$0xff] %v1677
    // Predicated region
    $region34: #{tpu_custom_call.1} parent=1 // pred_check
      _
    $region35: #{tpu_custom_call.1} parent=1 // pred_check_branch
      %1684 = sbr.rel (0) target = $region37
    $region36: #{tpu_custom_call.1} parent=1 // pred_region
      %s1686 = ssub.s32 128, 128
      %1687 = vsyncadd [#allocation5], %s1686
      %s1689 = sshll.u32 [#allocation8], 4
      %s1690 = int_to_ptr.vmem [resolvable:$true] %s1689
      %1692 = dma.vmem_to_hbm [thread:$0]  %s1690, 128, %s6, [#allocation5]
    $region37: #{tpu_custom_call.1} parent=1 // pred_fallthru
      _
    // Predicated region
    $region38: #{tpu_custom_call.1} parent=1 // pred_check
      _
    $region39: #{tpu_custom_call.1} parent=1 // pred_check_branch
      %1694 = sbr.rel (0) target = $region41
    $region40: #{tpu_custom_call.1} parent=1 // pred_region
      %1695 = dma.done [#allocation5], 128
    $region41: #{tpu_custom_call.1} parent=1 // pred_fallthru
      _
    %1696 = vsyncpa [#allocation4], 1
    %1697 = vsyncpa [#allocation7], 1
    %1698 = vsyncpa [#allocation5], 1

</llo_original>
